<compile_context>
chip_gen: v7x
topology: tpu7x:2x2x1
jax: 0.10.0
libtpu: 0.0.40
codegen_flags: <defaults>
</compile_context>

<pallas_src>
import numpy as np

import jax
import jax.numpy as jnp
from jax import lax
from jax.experimental import pallas as pl
from jax.experimental.pallas import tpu as pltpu


def _round_up(x, m):
    return (x + m - 1) // m * m


def _cdiv(a, b):
    return -(-a // b)


def _pick_tile(dim, cap=512):
    """Largest power-of-two tile <= cap that divides round_up(dim, 128)."""
    dp = _round_up(dim, 128)
    t = cap
    while t > 128 and dp % t:
        t //= 2
    return t


# ----------------------------------------------------------------------------
# Tiled matmul (+ optional bias) -- hoisted gate matmul and Projector linears
# ----------------------------------------------------------------------------

def _mm_kernel(x_ref, w_ref, b_ref, o_ref, acc_ref):
    @pl.when(pl.program_id(2) == 0)
    def _():
        acc_ref[...] = jnp.zeros_like(acc_ref)

    acc_ref[...] += jnp.dot(x_ref[...], w_ref[...],
                            preferred_element_type=jnp.float32)

    @pl.when(pl.program_id(2) == pl.num_programs(2) - 1)
    def _():
        o_ref[...] = (acc_ref[...] + b_ref[...]).astype(o_ref.dtype)


def matmul_bias(x, w_t, bias=None, out_dtype=jnp.float32):
    """y = x @ w_t (+ bias); bf16 MXU operands, f32 accumulation, tiled grid.

    Padding/trim are skipped entirely when the operands are already aligned,
    which is the case for all large matmuls in this file (only the tiny
    Projector state matmuls take the pad/trim path).
    """
    M, K = x.shape
    K2, N = w_t.shape
    assert K == K2
    tm, tn, tk = _pick_tile(M), _pick_tile(N), _pick_tile(K)
    Mp, Np, Kp = _round_up(M, tm), _round_up(N, tn), _round_up(K, tk)

    xp = x.astype(jnp.bfloat16)
    if (Mp, Kp) != (M, K):
        xp = jnp.pad(xp, ((0, Mp - M), (0, Kp - K)))
    wp = w_t.astype(jnp.bfloat16)
    if (Kp, Np) != (K, N):
        wp = jnp.pad(wp, ((0, Kp - K), (0, Np - N)))
    if bias is None:
        bp = jnp.zeros((1, Np), jnp.float32)
    else:
        bp = jnp.pad(bias.astype(jnp.float32), (0, Np - N)).reshape(1, Np)

    out = pl.pallas_call(
        _mm_kernel,
        out_shape=jax.ShapeDtypeStruct((Mp, Np), out_dtype),
        grid_spec=pltpu.PrefetchScalarGridSpec(
            num_scalar_prefetch=0,
            grid=(Mp // tm, Np // tn, Kp // tk),
            in_specs=[
                pl.BlockSpec((tm, tk), lambda i, j, k: (i, k)),
                pl.BlockSpec((tk, tn), lambda i, j, k: (k, j)),
                pl.BlockSpec((1, tn), lambda i, j, k: (0, j)),
            ],
            out_specs=pl.BlockSpec((tm, tn), lambda i, j, k: (i, j)),
            scratch_shapes=[pltpu.VMEM((tm, tn), jnp.float32)],
        ),
        compiler_params=pltpu.CompilerParams(
            dimension_semantics=("parallel", "parallel", "arbitrary")),
    )(xp, wp, bp)
    if (Mp, Np) != (M, N):
        out = out[:M, :N]
    return out


# ----------------------------------------------------------------------------
# LSTM recurrence: grid = (direction, time_chunk), h/c carried in VMEM scratch
# ----------------------------------------------------------------------------

def _make_lstm_kernel(Tt, Hp, unroll):
    def kernel(lens_ref, gx_ref, whh_ref, out_ref, hN_ref, cN_ref, h_sc, c_sc):
        d = pl.program_id(0)            # direction: 0 = forward, 1 = reverse
        c = pl.program_id(1)            # time-chunk index (per direction)
        nc = pl.num_programs(1)

        @pl.when(c == 0)
        def _():
            h_sc[...] = jnp.zeros_like(h_sc)
            c_sc[...] = jnp.zeros_like(c_sc)

        lens = lens_ref[...]                               # (Bp, 1) int32
        t_base = (d * (nc - 1) + (1 - 2 * d) * c) * Tt     # fwd: c*Tt ; rev: (nc-1-c)*Tt

        def body(s, carry):
            h, cc = carry
            t_loc = d * (Tt - 1) + (1 - 2 * d) * s         # fwd: s ; rev: Tt-1-s
            gx = gx_ref[t_loc].astype(jnp.float32)         # (Bp, 4Hp) precomputed x-gates
            gates = gx + jnp.dot(h.astype(jnp.bfloat16), whh_ref[...],
                                 preferred_element_type=jnp.float32)
            i_g = jax.nn.sigmoid(gates[:, 0 * Hp:1 * Hp])
            f_g = jax.nn.sigmoid(gates[:, 1 * Hp:2 * Hp])
            g_g = jnp.tanh(gates[:, 2 * Hp:3 * Hp])
            o_g = jax.nn.sigmoid(gates[:, 3 * Hp:4 * Hp])
            c_new = f_g * cc + i_g * g_g
            h_new = o_g * jnp.tanh(c_new)

            mask = (t_base + t_loc) < lens                 # packed-seq mask (Bp,1)
            out_ref[t_loc] = jnp.where(mask, h_new, 0.0).astype(out_ref.dtype)
            return (jnp.where(mask, h_new, h), jnp.where(mask, c_new, cc))

        hN, cN = lax.fori_loop(0, Tt, body, (h_sc[...], c_sc[...]), unroll=unroll)
        h_sc[...] = hN
        c_sc[...] = cN

        @pl.when(c == nc - 1)
        def _():
            hN_ref[...] = hN
            cN_ref[...] = cN

    return kernel


def lstm_layer(gates, lens_pad, whh_t, *, Tt, gx_buffers=2, vmem_limit_bytes=None):
    """Run all directions of one LSTM layer.

    gates:    (T_pad, Bp, ndir*4Hp)   bf16/f32 -- precomputed x @ Wih^T + bias
    lens_pad: (Bp, 1) int32
    whh_t:    (ndir, Hp, 4*Hp) bf16
    Returns:
      out (T_pad, Bp, ndir*Hp) bf16 fused [fwd | rev] hidden states,
      hN, cN (ndir, Bp, Hp) f32 final states.
    """
    T_pad, Bp, _ = gates.shape
    ndir, Hp, G = whh_t.shape
    nc = T_pad // Tt
    kernel = _make_lstm_kernel(Tt, Hp, unroll=2)

    def t_blk(d, c):
        # forward direction walks chunks left->right, reverse right->left
        return d * (nc - 1) + (1 - 2 * d) * c

    gx_kwargs = {}
    if gx_buffers > 2:
        gx_kwargs["pipeline_mode"] = pl.Buffered(gx_buffers)

    cp_kwargs = {}
    if vmem_limit_bytes is not None:
        cp_kwargs["vmem_limit_bytes"] = int(vmem_limit_bytes)

    out, hN, cN = pl.pallas_call(
        kernel,
        out_shape=(
            jax.ShapeDtypeStruct((T_pad, Bp, ndir * Hp), jnp.bfloat16),
            jax.ShapeDtypeStruct((ndir, Bp, Hp), jnp.float32),
            jax.ShapeDtypeStruct((ndir, Bp, Hp), jnp.float32),
        ),
        grid_spec=pltpu.PrefetchScalarGridSpec(
            num_scalar_prefetch=0,
            grid=(ndir, nc),
            in_specs=[
                pl.BlockSpec((Bp, 1), lambda d, c: (0, 0)),                  # lengths
                pl.BlockSpec((Tt, Bp, G), lambda d, c: (t_blk(d, c), 0, d),  # gates chunk
                             **gx_kwargs),
                pl.BlockSpec((None, Hp, G), lambda d, c: (d, 0, 0)),         # Whh^T
            ],
            out_specs=(
                pl.BlockSpec((Tt, Bp, Hp), lambda d, c: (t_blk(d, c), 0, d)),
                pl.BlockSpec((None, Bp, Hp), lambda d, c: (d, 0, 0)),
                pl.BlockSpec((None, Bp, Hp), lambda d, c: (d, 0, 0)),
            ),
            scratch_shapes=[pltpu.VMEM((Bp, Hp), jnp.float32),
                            pltpu.VMEM((Bp, Hp), jnp.float32)],
        ),
        compiler_params=pltpu.CompilerParams(
            dimension_semantics=("parallel", "arbitrary"), **cp_kwargs),
    )(lens_pad, gates, whh_t)
    return out, hN, cN


# ----------------------------------------------------------------------------
# Parameter init (PyTorch-like uniform(-1/sqrt(H), 1/sqrt(H)))
# ----------------------------------------------------------------------------

def init_encoder_params(key, word_vec_size, hidden_size, layers,
                        bidirectional=True, decoder_layers=None):
    H = hidden_size
    k = 1.0 / np.sqrt(H)
    num_dir = 2 if bidirectional else 1
    params = {"rnn": {}, "proj": {}}

    def u(key, shape):
        return jax.random.uniform(key, shape, jnp.float32, minval=-k, maxval=k)

    for l in range(layers):
        in_size = word_vec_size if l == 0 else H * num_dir
        for d in range(num_dir):
            key, k1, k2, k3, k4 = jax.random.split(key, 5)
            params["rnn"][(l, d)] = {
                "w_ih": u(k1, (4 * H, in_size)),
                "w_hh": u(k2, (4 * H, H)),
                "b_ih": u(k3, (4 * H,)),
                "b_hh": u(k4, (4 * H,)),
            }

    if bidirectional:
        key, k1, k2, k3 = jax.random.split(key, 4)
        params["proj"]["w_hdir"] = u(k1, (H, 2 * H))
        params["proj"]["w_cdir"] = u(k2, (H, 2 * H))
        params["proj"]["w_odir"] = u(k3, (H, 2 * H))
    if decoder_layers is not None and decoder_layers != layers:
        key, k1, k2 = jax.random.split(key, 3)
        params["proj"]["w_hlayer"] = u(k1, (H * decoder_layers, H * layers))
        params["proj"]["w_clayer"] = u(k2, (H * decoder_layers, H * layers))
    return params


def prepare_encoder_params(params, *, word_vec_size, hidden_size, layers,
                           bidirectional=True, decoder_layers=None):
    """One-time prep: gate-pad H->Hp (x128), pad inputs of deeper layers to the
    fused padded layout (ndir*Hp), transpose, fuse biases, cast to bf16."""
    H = hidden_size
    Hp = _round_up(H, 128)
    ndir = 2 if bidirectional else 1
    Ep = _round_up(word_vec_size, 128)
    prep = {"Hp": Hp, "ndir": ndir, "Ep": Ep, "rnn": [], "proj": {}}

    def pad_gate_rows(w):   # (4H, Din) -> (4Hp, Din): pad each gate block H->Hp
        Din = w.shape[1]
        return jnp.pad(w.reshape(4, H, Din),
                       ((0, 0), (0, Hp - H), (0, 0))).reshape(4 * Hp, Din)

    for l in range(layers):
        wih_t, bias, whh_t = [], [], []
        for d in range(ndir):
            p = params["rnn"][(l, d)]
            w = p["w_ih"]                                        # (4H, in_size)
            if l == 0:
                w = jnp.pad(w, ((0, 0), (0, Ep - word_vec_size)))
            else:
                # input cols [fwd H | rev H] -> padded fused layout [fwd Hp | rev Hp]
                w = jnp.pad(w.reshape(4 * H, ndir, H),
                            ((0, 0), (0, 0), (0, Hp - H))).reshape(4 * H, ndir * Hp)
            wih_t.append(pad_gate_rows(w).T)                     # (Din_pad, 4Hp)
            b = jnp.pad((p["b_ih"] + p["b_hh"]).reshape(4, H),
                        ((0, 0), (0, Hp - H))).reshape(4 * Hp)
            bias.append(b)
            wh = jnp.pad(p["w_hh"].reshape(4, H, H),
                         ((0, 0), (0, Hp - H), (0, Hp - H))).reshape(4 * Hp, Hp)
            whh_t.append(wh.T)                                   # (Hp, 4Hp)
        prep["rnn"].append({
            "wih_t": jnp.concatenate(wih_t, axis=1).astype(jnp.bfloat16),  # (Din_pad, ndir*4Hp)
            "bias": jnp.concatenate(bias, axis=0).astype(jnp.float32),     # (ndir*4Hp,)
            "whh_t": jnp.stack(whh_t, axis=0).astype(jnp.bfloat16),        # (ndir, Hp, 4Hp)
        })

    if bidirectional:
        # Output projection consumes the padded fused layer output (ndir*Hp cols);
        # its output is kept padded to Hp so the big matmul stays lane-aligned.
        w_t = params["proj"]["w_odir"].T                          # (2H, H)
        w_t = jnp.pad(w_t.reshape(ndir, H, H),
                      ((0, 0), (0, Hp - H), (0, Hp - H))).reshape(ndir * Hp, Hp)
        prep["proj"]["w_odir_t"] = w_t.astype(jnp.bfloat16)
        # hidden/cell direction projections act on tiny exact (L, B, 2H) views
        prep["proj"]["w_hdir_t"] = params["proj"]["w_hdir"].T.astype(jnp.bfloat16)
        prep["proj"]["w_cdir_t"] = params["proj"]["w_cdir"].T.astype(jnp.bfloat16)
    if decoder_layers is not None and decoder_layers != layers:
        prep["proj"]["w_hlayer_t"] = params["proj"]["w_hlayer"].T.astype(jnp.bfloat16)
        prep["proj"]["w_clayer_t"] = params["proj"]["w_clayer"].T.astype(jnp.bfloat16)
    return prep


# ----------------------------------------------------------------------------
# Encoder forward (glue in plain JAX, hot loops in Pallas)
# ----------------------------------------------------------------------------

def encoder_forward(prep, input_seq, input_lengths, *, hidden_size, layers,
                    bidirectional=True, decoder_layers=None,
                    vmem_budget_bytes=44 << 20, gx_dtype=jnp.bfloat16):
    """input_seq: (T, B, E) f32; input_lengths: host numpy int array (B,).

    gx_dtype: dtype of the precomputed gate pre-activations. bf16 halves HBM/VMEM
    traffic; use jnp.float32 for tighter parity with a float32 PyTorch LSTM.
    """
    H = hidden_size
    Hp, ndir, Ep = prep["Hp"], prep["ndir"], prep["Ep"]
    T_in, B, E = input_seq.shape

    lengths_np = np.asarray(input_lengths)
    T = int(lengths_np.max())            # pack_padded + pad_packed => trim to max len
    assert T <= T_in

    Bp = _round_up(B, 16)                # sublane / bf16-packing alignment
    gx_bytes = np.dtype(gx_dtype).itemsize

    # --- time-chunk size derived from a VMEM budget (v7x: 64 MiB per TC) -------
    fixed = 2 * Hp * 4 * Hp * 2          # Whh^T block, double-buffered, bf16
    fixed += 2 * Bp * Hp * 4             # h/c VMEM scratch (f32)
    fixed += 2 * 2 * Bp * Hp * 4         # hN/cN output blocks, double-buffered
    per_t = Bp * (4 * Hp * gx_bytes * 2 + Hp * 2 * 2)   # gx chunk (2 buf) + out chunk (bf16, 2 buf)
    stream_budget = max(vmem_budget_bytes - fixed, per_t * 8)
    Tt = max(8, min((stream_budget // per_t) // 8 * 8, _round_up(T, 8)))
    nc = _cdiv(T, Tt)
    Tt = _round_up(_cdiv(T, nc), 8)
    T_pad = Tt * nc
    gx_buffers = 3 if nc >= 4 else 2     # extra gx buffer when chunks are small/many
    vmem_est = fixed + per_t * Tt + (Tt * Bp * 4 * Hp * gx_bytes if gx_buffers == 3 else 0)
    vmem_limit = int(min(max(vmem_est + (8 << 20), 16 << 20), 100 << 20))

    # --- pad the input ONCE; everything stays (T_pad, Bp, 128k)-aligned after --
    x = jnp.asarray(input_seq, jnp.float32)[:T]
    x = jnp.pad(x, ((0, T_pad - T), (0, Bp - B), (0, Ep - E))).astype(jnp.bfloat16)
    lens_pad = jnp.pad(jnp.asarray(lengths_np, jnp.int32).reshape(B, 1),
                       ((0, Bp - B), (0, 0)))   # padded batch rows have length 0

    h_list, c_list = [], []
    layer_in = x                                                  # (T_pad, Bp, Din_pad)
    for l in range(layers):
        wl = prep["rnn"][l]
        Din = layer_in.shape[-1]

        # Hoisted input-to-hidden matmul for BOTH directions: one big MXU matmul.
        # Operands are already aligned -> no pad/trim; the reshape below is free.
        gx = matmul_bias(layer_in.reshape(T_pad * Bp, Din), wl["wih_t"], wl["bias"],
                         out_dtype=gx_dtype)                      # (T_pad*Bp, ndir*4Hp)
        gx = gx.reshape(T_pad, Bp, ndir * 4 * Hp)

        out, hN, cN = lstm_layer(gx, lens_pad, wl["whh_t"], Tt=Tt,
                                 gx_buffers=gx_buffers,
                                 vmem_limit_bytes=vmem_limit)
        layer_in = out                           # fused (T_pad, Bp, ndir*Hp) bf16, stays padded
        for d in range(ndir):
            h_list.append(hN[d, :B, :H])
            c_list.append(cN[d, :B, :H])
        # (inter-layer dropout skipped -- eval mode)

    hidden_state = jnp.stack(h_list, axis=0)                      # (layers*ndir, B, H)
    state_cell = jnp.stack(c_list, axis=0)

    # ---- Projector (reference nn.Linear layers all have bias=False) ------------
    # Flat reshapes intentionally reproduce torch's .view on the contiguous
    # (layers*num_dir, B, H) state tensors, exactly as the reference module does.
    if bidirectional:
        hs = hidden_state.reshape(layers * B, 2 * H)
        cs = state_cell.reshape(layers * B, 2 * H)
        hidden_state = matmul_bias(hs, prep["proj"]["w_hdir_t"]).reshape(layers, B, H)
        state_cell = matmul_bias(cs, prep["proj"]["w_cdir_t"]).reshape(layers, B, H)
        outputs = matmul_bias(layer_in.reshape(T_pad * Bp, ndir * Hp),
                              prep["proj"]["w_odir_t"])           # aligned, no pad/trim
        outputs = outputs.reshape(T_pad, Bp, Hp)[:T, :B, :H]      # single final trim
    else:
        outputs = layer_in[:T, :B, :H].astype(jnp.float32)

    if decoder_layers is not None and decoder_layers != layers:
        hidden_state = matmul_bias(hidden_state.reshape(B, H * layers),
                                   prep["proj"]["w_hlayer_t"]).reshape(decoder_layers, B, H)
        state_cell = matmul_bias(state_cell.reshape(B, H * layers),
                                 prep["proj"]["w_clayer_t"]).reshape(decoder_layers, B, H)

    return outputs, hidden_state, state_cell


# ----------------------------------------------------------------------------
# Pure-JAX reference (float32) for correctness checking
# ----------------------------------------------------------------------------

def _reference_encoder(params, input_seq, input_lengths, *, hidden_size, layers,
                       bidirectional=True, decoder_layers=None):
    H = hidden_size
    ndir = 2 if bidirectional else 1
    lengths = jnp.asarray(np.asarray(input_lengths), jnp.int32)
    T = int(np.asarray(input_lengths).max())
    x = jnp.asarray(input_seq, jnp.float32)[:T]
    B = x.shape[1]

    def run_dir(xs, p, reverse):
        w_ih, w_hh = p["w_ih"], p["w_hh"]
        b = p["b_ih"] + p["b_hh"]

        def step(carry, inp):
            h, c = carry
            t, xt = inp
            g = xt @ w_ih.T + h @ w_hh.T + b
            i = jax.nn.sigmoid(g[:, 0 * H:1 * H])
            f = jax.nn.sigmoid(g[:, 1 * H:2 * H])
            gg = jnp.tanh(g[:, 2 * H:3 * H])
            o = jax.nn.sigmoid(g[:, 3 * H:4 * H])
            c_new = f * c + i * gg
            h_new = o * jnp.tanh(c_new)
            m = (t < lengths)[:, None]
            return ((jnp.where(m, h_new, h), jnp.where(m, c_new, c)),
                    jnp.where(m, h_new, 0.0))

        init = (jnp.zeros((B, H), jnp.float32), jnp.zeros((B, H), jnp.float32))
        (hN, cN), ys = lax.scan(step, init, (jnp.arange(T), xs), reverse=reverse)
        return ys, hN, cN

    layer_in = x
    h_list, c_list = [], []
    for l in range(layers):
        outs = []
        for d in range(ndir):
            ys, hN, cN = run_dir(layer_in, params["rnn"][(l, d)], reverse=(d == 1))
            outs.append(ys)
            h_list.append(hN)
            c_list.append(cN)
        layer_in = jnp.concatenate(outs, axis=-1)
    outputs = layer_in
    hidden_state = jnp.stack(h_list, 0)
    state_cell = jnp.stack(c_list, 0)
    if bidirectional:
        hidden_state = hidden_state.reshape(layers, B, 2 * H) @ params["proj"]["w_hdir"].T
        state_cell = state_cell.reshape(layers, B, 2 * H) @ params["proj"]["w_cdir"].T
        outputs = outputs @ params["proj"]["w_odir"].T
    if decoder_layers is not None and decoder_layers != layers:
        hidden_state = (hidden_state.reshape(B, H * layers)
                        @ params["proj"]["w_hlayer"].T).reshape(decoder_layers, B, H)
        state_cell = (state_cell.reshape(B, H * layers)
                      @ params["proj"]["w_clayer"].T).reshape(decoder_layers, B, H)
    return outputs, hidden_state, state_cell


# ----------------------------------------------------------------------------
# Demo
# ----------------------------------------------------------------------------

if __name__ == "__main__":
    T, B, E, H, L = 8, 2, 16, 32, 2
    bidirectional = True
    decoder_layers = None

    key = jax.random.PRNGKey(0)
    key, pkey, xkey = jax.random.split(key, 3)

    params = init_encoder_params(pkey, E, H, L,
                                 bidirectional=bidirectional,
                                 decoder_layers=decoder_layers)
    prep = prepare_encoder_params(params, word_vec_size=E, hidden_size=H, layers=L,
                                  bidirectional=bidirectional,
                                  decoder_layers=decoder_layers)

    input_seq = jax.random.normal(xkey, (T, B, E), jnp.float32)
    input_lengths = np.array([8, 5], dtype=np.int64)   # pack_padded lengths

    outputs, hidden_state, state_cell = encoder_forward(
        prep, input_seq, input_lengths,
        hidden_size=H, layers=L,
        bidirectional=bidirectional, decoder_layers=decoder_layers)
    jax.block_until_ready((outputs, hidden_state, state_cell))

    Tmax = int(np.max(input_lengths))
    assert outputs.shape == (Tmax, B, H)
    assert hidden_state.shape == (L, B, H)
    assert state_cell.shape == (L, B, H)
    assert bool(jnp.all(jnp.isfinite(outputs)))
    assert bool(jnp.all(jnp.isfinite(hidden_state)))
    assert bool(jnp.all(jnp.isfinite(state_cell)))

    # Correctness vs a pure-JAX float32 reference (bf16 gate pre-activations and
    # bf16 weights give ~1e-2-level differences; tolerance chosen accordingly).
    ref = _reference_encoder(params, input_seq, input_lengths,
                             hidden_size=H, layers=L,
                             bidirectional=bidirectional,
                             decoder_layers=decoder_layers)
    for got, want in zip((outputs, hidden_state, state_cell), ref):
        np.testing.assert_allclose(np.asarray(got, np.float32),
                                   np.asarray(want, np.float32),
                                   atol=5e-2, rtol=5e-2)

    print("KERNEL_OK")
</pallas_src>

<mosaic_0001>
module attributes {stable_mosaic.version = 11 : i64} {
  func.func @_mm_kernel(%arg0: i32, %arg1: i32, %arg2: i32, %arg3: memref<128x128xbf16, #tpu.memory_space<vmem>>, %arg4: memref<128x512xbf16, #tpu.memory_space<vmem>>, %arg5: memref<1x512xf32, #tpu.memory_space<vmem>>, %arg6: memref<128x512xbf16, #tpu.memory_space<vmem>>, %arg7: memref<128x512xf32, #tpu.memory_space<vmem>>) attributes {dimension_semantics = [#tpu.dimension_semantics<parallel>, #tpu.dimension_semantics<parallel>, #tpu.dimension_semantics<arbitrary>], iteration_bounds = array<i64: 1, 2, 1>, scalar_prefetch = 0 : i64, scratch_operands = 1 : i64, tpu.core_type = #tpu.core_type<tc>, window_params = [{transform_indices = @transform_0, window_bounds = array<i64: 128, 128>}, {transform_indices = @transform_1, window_bounds = array<i64: 128, 512>}, {transform_indices = @transform_2, window_bounds = array<i64: 1, 512>}, {transform_indices = @transform_3, window_bounds = array<i64: 128, 512>}]} {
    %c0_i32 = arith.constant 0 : i32
    %0 = arith.cmpi eq, %arg2, %c0_i32 : i32
    %1 = arith.extui %0 : i1 to i32
    %c0_i32_0 = arith.constant 0 : i32
    %2 = arith.cmpi ne, %1, %c0_i32_0 : i32
    scf.if %2 {
      %cst_10 = arith.constant 0.000000e+00 : f32
      %12 = vector.broadcast %cst_10 : f32 to vector<128x512xf32>
      %c0_11 = arith.constant 0 : index
      %c0_12 = arith.constant 0 : index
      %13 = vector.load %arg7[%c0_11, %c0_12] : memref<128x512xf32, #tpu.memory_space<vmem>>, vector<128x512xf32>
      tpu.vector_store %arg7[%c0_11, %c0_12], %12 {strides = array<i32>} : memref<128x512xf32, #tpu.memory_space<vmem>>, vector<128x512xf32>,
    } else {
    }
    %c0 = arith.constant 0 : index
    %c0_1 = arith.constant 0 : index
    %3 = vector.load %arg7[%c0, %c0_1] : memref<128x512xf32, #tpu.memory_space<vmem>>, vector<128x512xf32>
    %c0_2 = arith.constant 0 : index
    %c0_3 = arith.constant 0 : index
    %4 = vector.load %arg3[%c0_2, %c0_3] : memref<128x128xbf16, #tpu.memory_space<vmem>>, vector<128x128xbf16>
    %c0_4 = arith.constant 0 : index
    %c0_5 = arith.constant 0 : index
    %5 = vector.load %arg4[%c0_4, %c0_5] : memref<128x512xbf16, #tpu.memory_space<vmem>>, vector<128x512xbf16>
    %cst = arith.constant dense<0.000000e+00> : vector<128x512xf32>
    %6 = tpu.matmul %4, %5, %cst {dimension_numbers = #tpu.dot_dimension_numbers<[1], [0], [0], [1], [0, 0, 1, 1], [], []>} : vector<128x128xbf16>, vector<128x512xbf16>, vector<128x512xf32> -> vector<128x512xf32>
    %7 = arith.addf %3, %6 : vector<128x512xf32>
    %c0_6 = arith.constant 0 : index
    %c0_7 = arith.constant 0 : index
    %8 = vector.load %arg7[%c0_6, %c0_7] : memref<128x512xf32, #tpu.memory_space<vmem>>, vector<128x512xf32>
    tpu.vector_store %arg7[%c0_6, %c0_7], %7 {strides = array<i32>} : memref<128x512xf32, #tpu.memory_space<vmem>>, vector<128x512xf32>,
    %c0_i32_8 = arith.constant 0 : i32
    %9 = arith.cmpi eq, %arg2, %c0_i32_8 : i32
    %10 = arith.extui %9 : i1 to i32
    %c0_i32_9 = arith.constant 0 : i32
    %11 = arith.cmpi ne, %10, %c0_i32_9 : i32
    scf.if %11 {
      %c0_10 = arith.constant 0 : index
      %c0_11 = arith.constant 0 : index
      %12 = vector.load %arg7[%c0_10, %c0_11] : memref<128x512xf32, #tpu.memory_space<vmem>>, vector<128x512xf32>
      %c0_12 = arith.constant 0 : index
      %c0_13 = arith.constant 0 : index
      %13 = vector.load %arg5[%c0_12, %c0_13] : memref<1x512xf32, #tpu.memory_space<vmem>>, vector<1x512xf32>
      %14 = vector.broadcast %13 : vector<1x512xf32> to vector<128x512xf32>
      %15 = arith.addf %12, %14 : vector<128x512xf32>
      %16 = arith.truncf %15 : vector<128x512xf32> to vector<128x512xbf16>
      %c0_14 = arith.constant 0 : index
      %c0_15 = arith.constant 0 : index
      %17 = vector.load %arg6[%c0_14, %c0_15] : memref<128x512xbf16, #tpu.memory_space<vmem>>, vector<128x512xbf16>
      tpu.vector_store %arg6[%c0_14, %c0_15], %16 {strides = array<i32>} : memref<128x512xbf16, #tpu.memory_space<vmem>>, vector<128x512xbf16>,
    } else {
    }
    return
  }
  func.func @transform_0(%arg0: i32, %arg1: i32, %arg2: i32) -> (i32, i32) {
    %c0_i32 = arith.constant 0 : i32
    return %arg0, %arg2 : i32, i32
  }
  func.func @transform_1(%arg0: i32, %arg1: i32, %arg2: i32) -> (i32, i32) {
    %c0_i32 = arith.constant 0 : i32
    return %arg2, %arg1 : i32, i32
  }
  func.func @transform_2(%arg0: i32, %arg1: i32, %arg2: i32) -> (i32, i32) {
    %c0_i32 = arith.constant 0 : i32
    %c0_i32_0 = arith.constant 0 : i32
    return %c0_i32, %arg1 : i32, i32
  }
  func.func @transform_3(%arg0: i32, %arg1: i32, %arg2: i32) -> (i32, i32) {
    %c0_i32 = arith.constant 0 : i32
    return %arg0, %arg1 : i32, i32
  }
}

</mosaic_0001>

<llo_original>
// kernel: tpu_custom_call.1
$region0: #{tpu_custom_call.1}
  #allocation0 [shape = 'u32[]', space=smem, size = 0x4, offset = 0x4, fixed_abs, tag = 'smem constant byte address 0x4 - core index']
  #allocation1 [shape = 'u32[144,128]{1,0:T(1,128)}', space=vmem, size = 0x12000, scoped, tag = 'internal scratch']
  #allocation2 [shape = 'f32[128,512]{1,0:T(8,128)}', space=vmem, size = 0x40000, scoped, tag = 'scratch operand']
  %s0 = inlined_call_operand.hbm [shape: bf16[128,128], index: 0, kind: input, shape index: {}]
  %s1 = inlined_call_operand.hbm [shape: bf16[128,1024], index: 1, kind: input, shape index: {}]
  %s2 = inlined_call_operand.hbm [shape: f32[1,1024], index: 2, kind: input, shape index: {}]
  %s3 = inlined_call_operand.hbm [shape: bf16[128,1024], index: 3, kind: output, shape index: {}]
  %s4 = sld [smem:[#allocation0]]
  $region65: #{tpu_custom_call.1} parent=0
    _
  %s6 = ssub.s32 1, %s4
  %s7 = scalar_select 0, %s6, %s4
  $region1: #{tpu_custom_call.1} parent=0
    #allocation3 [shape = 'u8[32768]{0}', space=vmem, size = 0x8000, scoped, tag = 'input window, operand 0, single buffered']
    #allocation4 [shape = 's32[2]{0}', space=sflag, size = 0x8, scoped, tag = 'scoped memory for tpu_custom_call.1']
    #allocation5 [shape = 's32[2]{0}', space=sflag, size = 0x8, scoped, tag = 'scoped memory for tpu_custom_call.1']
    #allocation6 [shape = 'u8[262144]{0}', space=vmem, size = 0x40000, scoped, tag = 'input window, operand 1']
    #allocation7 [shape = 's32[2]{0}', space=sflag, size = 0x8, scoped, tag = 'scoped memory for tpu_custom_call.1']
    #allocation8 [shape = 'u8[4096]{0}', space=vmem, size = 0x1000, scoped, tag = 'input window, operand 2']
    #allocation9 [shape = 'u8[262144]{0}', space=vmem, size = 0x40000, scoped, tag = 'output window, operand 0']
    %8 = vsyncpa [#allocation4], 0
    %9 = vsyncpa [#allocation7], 0
    %s10 = scalar_lea.sflag [#allocation7], 1
    %11 = vsyncpa %s10, 0
    %12 = vsyncpa [#allocation5], 0
    %s13 = scalar_lea.sflag [#allocation5], 1
    %14 = vsyncpa %s13, 0
    loop: start=0, step=1, limit=4
    $region2: #{tpu_custom_call.1} parent=1 // loop_pre_header
      _
    $region3: #{tpu_custom_call.1} parent=1 // loop_header
      %s16 = sphi 0, %s20
      %p17 = scmp.ge.s32.totalorder %s16, 4
      %s23 = sphi 0, %s42
      %s24 = sphi 0, %s38
      %s25 = sphi 0, %s34
      %s26 = sphi 0, %s23
      %s27 = sphi 0, %s24
      %s28 = sphi 0, %s25
      %s29 = sphi 0, %s26
      %s30 = sphi 0, %s27
      %s31 = sphi 0, %s28
      %s47 = sphi 0, %s49
      %s50 = sphi 0, %s47
      %s51 = sphi 0, %s50
      %s67 = sphi 0, %s51
      %s75 = sphi 0, %s77
      %s78 = sphi 0, %s75
      %s79 = sphi 0, %s78
      %s95 = sphi 0, %s79
      %s101 = sphi 0, %s103
      %s104 = sphi 0, %s101
      %s105 = sphi 0, %s104
      %s121 = sphi 0, %s105
      %s129 = sphi 0, %s131
      %s132 = sphi 0, %s129
      %s133 = sphi 0, %s132
      %s149 = sphi 0, %s133
    $region4: #{tpu_custom_call.1} parent=1 // loop_header_branch
      %19 = sbr.rel (%p17) target = $region8
    $region5: #{tpu_custom_call.1} parent=1 // loop_body
      %s21 = ssub.s32 %s16, 1
      %s22 = ssub.s32 %s16, 2
      %s32 = sadd.s32 1, %s25
      %p33 = scmp.ge.s32.totalorder %s32, 1
      %s34 = scalar_select %p33, 0, %s32
      %s35 = sadd.s32 1, %s24
      %s36 = scalar_select %p33, %s35, %s24
      %p37 = scmp.ge.s32.totalorder %s36, 2
      %s38 = scalar_select %p37, 0, %s36
      %s39 = sadd.s32 1, %s23
      %s40 = scalar_select %p37, %s39, %s23
      %p41 = scmp.ge.s32.totalorder %s40, 1
      %s42 = scalar_select %p41, 0, %s40
      %s43 = ssub.s32 %s23, %s42
      %s44 = ssub.s32 %s25, %s34
      %s45 = sor.u32 %s43, %s44
      %p46 = scmp.eq.s32.totalorder %s45, 0
      %s48 = sadd.s32 %s47, 1
      %s49 = scalar_select %p46, %s47, %s48
      %p52 = pneg %p46
      %p53 = scmp.eq.s32.totalorder %s16, 1
      %p54 = por %p52, %p53
      %p55 = scmp.ne.s32.totalorder %s47, %s50
      %p56 = scmp.eq.s32.totalorder %s16, 0
      %p57 = por %p55, %p56
      %p58 = scmp.ne.s32.totalorder %s47, %s50
      %p59 = scmp.eq.s32.totalorder %s21, 1
      %p60 = por %p58, %p59
      %p61 = scmp.ne.s32.totalorder %s50, %s51
      %p62 = scmp.eq.s32.totalorder %s21, 0
      %p63 = por %p61, %p62
      %p64 = scmp.ne.s32.totalorder %s50, %s51
      %p65 = scmp.eq.s32.totalorder %s22, 1
      %p66 = por %p64, %p65
      %p68 = scmp.ne.s32.totalorder %s51, %s67
      %p69 = scmp.eq.s32.totalorder %s22, 0
      %p70 = por %p68, %p69
      %s71 = ssub.s32 %s25, %s34
      %s72 = ssub.s32 %s24, %s38
      %s73 = sor.u32 %s71, %s72
      %p74 = scmp.eq.s32.totalorder %s73, 0
      %s76 = sadd.s32 %s75, 1
      %s77 = scalar_select %p74, %s75, %s76
      %p80 = pneg %p74
      %p81 = scmp.eq.s32.totalorder %s16, 1
      %p82 = por %p80, %p81
      %p83 = scmp.ne.s32.totalorder %s75, %s78
      %p84 = scmp.eq.s32.totalorder %s16, 0
      %p85 = por %p83, %p84
      %p86 = scmp.ne.s32.totalorder %s75, %s78
      %p87 = scmp.eq.s32.totalorder %s21, 1
      %p88 = por %p86, %p87
      %p89 = scmp.ne.s32.totalorder %s78, %s79
      %p90 = scmp.eq.s32.totalorder %s21, 0
      %p91 = por %p89, %p90
      %p92 = scmp.ne.s32.totalorder %s78, %s79
      %p93 = scmp.eq.s32.totalorder %s22, 1
      %p94 = por %p92, %p93
      %p96 = scmp.ne.s32.totalorder %s79, %s95
      %p97 = scmp.eq.s32.totalorder %s22, 0
      %p98 = por %p96, %p97
      %s99 = ssub.s32 %s24, %s38
      %p100 = scmp.eq.s32.totalorder %s99, 0
      %s102 = sadd.s32 %s101, 1
      %s103 = scalar_select %p100, %s101, %s102
      %p106 = pneg %p100
      %p107 = scmp.eq.s32.totalorder %s16, 1
      %p108 = por %p106, %p107
      %p109 = scmp.ne.s32.totalorder %s101, %s104
      %p110 = scmp.eq.s32.totalorder %s16, 0
      %p111 = por %p109, %p110
      %p112 = scmp.ne.s32.totalorder %s101, %s104
      %p113 = scmp.eq.s32.totalorder %s21, 1
      %p114 = por %p112, %p113
      %p115 = scmp.ne.s32.totalorder %s104, %s105
      %p116 = scmp.eq.s32.totalorder %s21, 0
      %p117 = por %p115, %p116
      %p118 = scmp.ne.s32.totalorder %s104, %s105
      %p119 = scmp.eq.s32.totalorder %s22, 1
      %p120 = por %p118, %p119
      %p122 = scmp.ne.s32.totalorder %s105, %s121
      %p123 = scmp.eq.s32.totalorder %s22, 0
      %p124 = por %p122, %p123
      %s125 = ssub.s32 %s23, %s42
      %s126 = ssub.s32 %s24, %s38
      %s127 = sor.u32 %s125, %s126
      %p128 = scmp.eq.s32.totalorder %s127, 0
      %s130 = sadd.s32 %s129, 1
      %s131 = scalar_select %p128, %s129, %s130
      %p134 = pneg %p128
      %p135 = scmp.eq.s32.totalorder %s16, 1
      %p136 = por %p134, %p135
      %p137 = scmp.ne.s32.totalorder %s129, %s132
      %p138 = scmp.eq.s32.totalorder %s16, 0
      %p139 = por %p137, %p138
      %p140 = scmp.ne.s32.totalorder %s129, %s132
      %p141 = scmp.eq.s32.totalorder %s21, 1
      %p142 = por %p140, %p141
      %p143 = scmp.ne.s32.totalorder %s132, %s133
      %p144 = scmp.eq.s32.totalorder %s21, 0
      %p145 = por %p143, %p144
      %p146 = scmp.ne.s32.totalorder %s132, %s133
      %p147 = scmp.eq.s32.totalorder %s22, 1
      %p148 = por %p146, %p147
      %p150 = scmp.ne.s32.totalorder %s133, %s149
      %p151 = scmp.eq.s32.totalorder %s22, 0
      %p152 = por %p150, %p151
      %p153 = scmp.le.s32.totalorder 1, %s16
      %p154 = scmp.lt.s32.totalorder %s16, 3
      %p155 = pnand %p153, %p154
      %p156 = pneg %p155
      // Predicated region
      $region9: #{tpu_custom_call.1} parent=5 // pred_check
        _
      $region10: #{tpu_custom_call.1} parent=5 // pred_check_branch
        %158 = sbr.rel (%p155) target = $region12
      $region11: #{tpu_custom_call.1} parent=5 // pred_region
        %s159 = ssub.s32 %s16, 1
        // Predicated region
        $region13: #{tpu_custom_call.1} parent=11 // pred_check
          %p160 = pneg %p63
        $region14: #{tpu_custom_call.1} parent=11 // pred_check_branch
          %162 = sbr.rel (%p160) target = $region16
        $region15: #{tpu_custom_call.1} parent=11 // pred_region
          %s163 = smul.u32 16, %s26
          %s165 = ssub.s32 1024, 1024
          %166 = vsyncadd [#allocation4], %s165
          %s167 = sadd.s32 %s28, %s163
          %s168 = smul.addr %s167, 64
          %s169 = scalar_lea.hbm %s0, %s168
          %s170 = sshll.u32 [#allocation3], 4
          %s171 = int_to_ptr.vmem [resolvable:$true] %s170
          %176 = dma.hbm_to_vmem [thread:$0]  %s169, 1024, %s171, [#allocation4], 64, 64, 4
        $region16: #{tpu_custom_call.1} parent=11 // pred_fallthru
          _
      $region12: #{tpu_custom_call.1} parent=5 // pred_fallthru
        _
      %p177 = scmp.lt.s32.totalorder %s16, 2
      // Predicated region
      $region17: #{tpu_custom_call.1} parent=5 // pred_check
        %p178 = pneg %p177
      $region18: #{tpu_custom_call.1} parent=5 // pred_check_branch
        %180 = sbr.rel (%p178) target = $region20
      $region19: #{tpu_custom_call.1} parent=5 // pred_region
        // Predicated region
        $region21: #{tpu_custom_call.1} parent=19 // pred_check
          %p181 = pneg %p85
        $region22: #{tpu_custom_call.1} parent=19 // pred_check_branch
          %183 = sbr.rel (%p181) target = $region24
        $region23: #{tpu_custom_call.1} parent=19 // pred_region
          %s184 = sand.u32 %s16, 1
          %s185 = scalar_lea.sflag [#allocation7], %s184
          %s186 = sand.u32 %s75, 1
          %s187 = smul.addr %s186, 256
          %s188 = scalar_lea.vmem [#allocation6], %s187
          %s189 = smul.u32 16, %s25
          %s190 = smul.u32 4, %s24
          %s192 = ssub.s32 4096, 4096
          %193 = vsyncadd %s185, %s192
          %s194 = smul.addr %s189, 8
          %s195 = sadd.s32 %s190, %s194
          %s196 = smul.addr %s195, 64
          %s197 = scalar_lea.hbm %s1, %s196
          %s198 = sshll.u32 %s188, 4
          %s199 = int_to_ptr.vmem [resolvable:$true] %s198
          %204 = dma.hbm_to_vmem [thread:$0]  %s197, 4096, %s199, %s185, 512, 256, 16
        $region24: #{tpu_custom_call.1} parent=19 // pred_fallthru
          _
        // Predicated region
        $region25: #{tpu_custom_call.1} parent=19 // pred_check
          %p205 = pneg %p111
        $region26: #{tpu_custom_call.1} parent=19 // pred_check_branch
          %207 = sbr.rel (%p205) target = $region28
        $region27: #{tpu_custom_call.1} parent=19 // pred_region
          %s208 = sand.u32 %s16, 1
          %s209 = scalar_lea.sflag [#allocation7], %s208
          %s210 = sand.u32 %s101, 1
          %s211 = smul.addr %s210, 4
          %s212 = scalar_lea.vmem [#allocation8], %s211
          %s213 = smul.u32 4, %s24
          %s215 = ssub.s32 64, 64
          %216 = vsyncadd %s209, %s215
          %s217 = smul.addr %s213, 16
          %s218 = scalar_lea.hbm %s2, %s217
          %s220 = sshll.u32 %s212, 4
          %s221 = int_to_ptr.vmem [resolvable:$true] %s220
          %223 = dma.hbm_to_vmem [thread:$0]  %s218, 64, %s221, %s209
        $region28: #{tpu_custom_call.1} parent=19 // pred_fallthru
          _
      $region20: #{tpu_custom_call.1} parent=5 // pred_fallthru
        _
      %p224 = scmp.le.s32.totalorder 1, %s16
      %p225 = scmp.lt.s32.totalorder %s16, 3
      %p226 = pnand %p224, %p225
      %p227 = pneg %p226
      // Predicated region
      $region29: #{tpu_custom_call.1} parent=5 // pred_check
        _
      $region30: #{tpu_custom_call.1} parent=5 // pred_check_branch
        %229 = sbr.rel (%p226) target = $region32
      $region31: #{tpu_custom_call.1} parent=5 // pred_region
        %s230 = ssub.s32 %s16, 1
        // Predicated region
        $region33: #{tpu_custom_call.1} parent=31 // pred_check
          %p231 = pneg %p63
        $region34: #{tpu_custom_call.1} parent=31 // pred_check_branch
          %233 = sbr.rel (%p231) target = $region36
        $region35: #{tpu_custom_call.1} parent=31 // pred_region
          %234 = dma.done [#allocation4], 1024
        $region36: #{tpu_custom_call.1} parent=31 // pred_fallthru
          _
        %s235 = sand.u32 %s21, 1
        %s236 = scalar_lea.sflag [#allocation7], %s235
        %s237 = sand.u32 %s78, 1
        %s238 = smul.addr %s237, 256
        %s239 = scalar_lea.vmem [#allocation6], %s238
        // Predicated region
        $region37: #{tpu_custom_call.1} parent=31 // pred_check
          %p240 = pneg %p91
        $region38: #{tpu_custom_call.1} parent=31 // pred_check_branch
          %242 = sbr.rel (%p240) target = $region40
        $region39: #{tpu_custom_call.1} parent=31 // pred_region
          %243 = dma.done %s236, 4096
        $region40: #{tpu_custom_call.1} parent=31 // pred_fallthru
          _
        %s244 = sand.u32 %s21, 1
        %s245 = scalar_lea.sflag [#allocation7], %s244
        %s246 = sand.u32 %s104, 1
        %s247 = smul.addr %s246, 4
        %s248 = scalar_lea.vmem [#allocation8], %s247
        // Predicated region
        $region41: #{tpu_custom_call.1} parent=31 // pred_check
          %p249 = pneg %p117
        $region42: #{tpu_custom_call.1} parent=31 // pred_check_branch
          %251 = sbr.rel (%p249) target = $region44
        $region43: #{tpu_custom_call.1} parent=31 // pred_region
          %252 = dma.done %s245, 64
        $region44: #{tpu_custom_call.1} parent=31 // pred_fallthru
          _
        %p253 = pneg %p63
        %p254 = pneg %p60
        %s255 = sand.u32 %s21, 1
        %s256 = scalar_lea.sflag [#allocation7], %s255
        %s257 = sand.u32 %s78, 1
        %s258 = smul.addr %s257, 256
        %s259 = scalar_lea.vmem [#allocation6], %s258
        %p260 = pneg %p91
        %p261 = pneg %p88
        %s262 = sand.u32 %s21, 1
        %s263 = scalar_lea.sflag [#allocation7], %s262
        %s264 = sand.u32 %s104, 1
        %s265 = smul.addr %s264, 4
        %s266 = scalar_lea.vmem [#allocation8], %s265
        %p267 = pneg %p117
        %p268 = pneg %p114
        %p269 = pneg %p145
        %p270 = pneg %p142
        %s271 = sand.u32 %s132, 1
        %s272 = scalar_lea.sflag [#allocation5], %s271
        %s273 = sand.u32 %s132, 1
        %s274 = smul.addr %s273, 256
        %s275 = scalar_lea.vmem [#allocation9], %s274
        %s276 = smul.u32 16, %s26
        %s277 = smul.u32 16, %s28
        %s278 = smul.u32 4, %s27
        %s279 = smul.u32 4, %s27
        %s280 = smul.u32 16, %s26
        %s281 = smul.u32 4, %s27
        %p283 = scmp.eq.s32.totalorder %s28, 0
        // Predicated region
        $region45: #{tpu_custom_call.1} parent=31 // pred_check
          %p284 = pneg %p283
        $region46: #{tpu_custom_call.1} parent=31 // pred_check_branch
          %286 = sbr.rel (%p284) target = $region48
        $region47: #{tpu_custom_call.1} parent=31 // pred_region
          %287 = vst [vmem:[#allocation2] sm:$0xff] 0.0
          %288 = vst [vmem:[#allocation2 + $0x8] sm:$0xff] 0.0
          %289 = vst [vmem:[#allocation2 + $0x10] sm:$0xff] 0.0
          %290 = vst [vmem:[#allocation2 + $0x18] sm:$0xff] 0.0
          %291 = vst [vmem:[#allocation2 + $0x20] sm:$0xff] 0.0
          %292 = vst [vmem:[#allocation2 + $0x28] sm:$0xff] 0.0
          %293 = vst [vmem:[#allocation2 + $0x30] sm:$0xff] 0.0
          %294 = vst [vmem:[#allocation2 + $0x38] sm:$0xff] 0.0
          %295 = vst [vmem:[#allocation2 + $0x40] sm:$0xff] 0.0
          %296 = vst [vmem:[#allocation2 + $0x48] sm:$0xff] 0.0
          %297 = vst [vmem:[#allocation2 + $0x50] sm:$0xff] 0.0
          %298 = vst [vmem:[#allocation2 + $0x58] sm:$0xff] 0.0
          %299 = vst [vmem:[#allocation2 + $0x60] sm:$0xff] 0.0
          %300 = vst [vmem:[#allocation2 + $0x68] sm:$0xff] 0.0
          %301 = vst [vmem:[#allocation2 + $0x70] sm:$0xff] 0.0
          %302 = vst [vmem:[#allocation2 + $0x78] sm:$0xff] 0.0
          %303 = vst [vmem:[#allocation2 + $0x80] sm:$0xff] 0.0
          %304 = vst [vmem:[#allocation2 + $0x88] sm:$0xff] 0.0
          %305 = vst [vmem:[#allocation2 + $0x90] sm:$0xff] 0.0
          %306 = vst [vmem:[#allocation2 + $0x98] sm:$0xff] 0.0
          %307 = vst [vmem:[#allocation2 + $0xa0] sm:$0xff] 0.0
          %308 = vst [vmem:[#allocation2 + $0xa8] sm:$0xff] 0.0
          %309 = vst [vmem:[#allocation2 + $0xb0] sm:$0xff] 0.0
          %310 = vst [vmem:[#allocation2 + $0xb8] sm:$0xff] 0.0
          %311 = vst [vmem:[#allocation2 + $0xc0] sm:$0xff] 0.0
          %312 = vst [vmem:[#allocation2 + $0xc8] sm:$0xff] 0.0
          %313 = vst [vmem:[#allocation2 + $0xd0] sm:$0xff] 0.0
          %314 = vst [vmem:[#allocation2 + $0xd8] sm:$0xff] 0.0
          %315 = vst [vmem:[#allocation2 + $0xe0] sm:$0xff] 0.0
          %316 = vst [vmem:[#allocation2 + $0xe8] sm:$0xff] 0.0
          %317 = vst [vmem:[#allocation2 + $0xf0] sm:$0xff] 0.0
          %318 = vst [vmem:[#allocation2 + $0xf8] sm:$0xff] 0.0
          %319 = vst [vmem:[#allocation2 + $0x100] sm:$0xff] 0.0
          %320 = vst [vmem:[#allocation2 + $0x108] sm:$0xff] 0.0
          %321 = vst [vmem:[#allocation2 + $0x110] sm:$0xff] 0.0
          %322 = vst [vmem:[#allocation2 + $0x118] sm:$0xff] 0.0
          %323 = vst [vmem:[#allocation2 + $0x120] sm:$0xff] 0.0
          %324 = vst [vmem:[#allocation2 + $0x128] sm:$0xff] 0.0
          %325 = vst [vmem:[#allocation2 + $0x130] sm:$0xff] 0.0
          %326 = vst [vmem:[#allocation2 + $0x138] sm:$0xff] 0.0
          %327 = vst [vmem:[#allocation2 + $0x140] sm:$0xff] 0.0
          %328 = vst [vmem:[#allocation2 + $0x148] sm:$0xff] 0.0
          %329 = vst [vmem:[#allocation2 + $0x150] sm:$0xff] 0.0
          %330 = vst [vmem:[#allocation2 + $0x158] sm:$0xff] 0.0
          %331 = vst [vmem:[#allocation2 + $0x160] sm:$0xff] 0.0
          %332 = vst [vmem:[#allocation2 + $0x168] sm:$0xff] 0.0
          %333 = vst [vmem:[#allocation2 + $0x170] sm:$0xff] 0.0
          %334 = vst [vmem:[#allocation2 + $0x178] sm:$0xff] 0.0
          %335 = vst [vmem:[#allocation2 + $0x180] sm:$0xff] 0.0
          %336 = vst [vmem:[#allocation2 + $0x188] sm:$0xff] 0.0
          %337 = vst [vmem:[#allocation2 + $0x190] sm:$0xff] 0.0
          %338 = vst [vmem:[#allocation2 + $0x198] sm:$0xff] 0.0
          %339 = vst [vmem:[#allocation2 + $0x1a0] sm:$0xff] 0.0
          %340 = vst [vmem:[#allocation2 + $0x1a8] sm:$0xff] 0.0
          %341 = vst [vmem:[#allocation2 + $0x1b0] sm:$0xff] 0.0
          %342 = vst [vmem:[#allocation2 + $0x1b8] sm:$0xff] 0.0
          %343 = vst [vmem:[#allocation2 + $0x1c0] sm:$0xff] 0.0
          %344 = vst [vmem:[#allocation2 + $0x1c8] sm:$0xff] 0.0
          %345 = vst [vmem:[#allocation2 + $0x1d0] sm:$0xff] 0.0
          %346 = vst [vmem:[#allocation2 + $0x1d8] sm:$0xff] 0.0
          %347 = vst [vmem:[#allocation2 + $0x1e0] sm:$0xff] 0.0
          %348 = vst [vmem:[#allocation2 + $0x1e8] sm:$0xff] 0.0
          %349 = vst [vmem:[#allocation2 + $0x1f0] sm:$0xff] 0.0
          %350 = vst [vmem:[#allocation2 + $0x1f8] sm:$0xff] 0.0
        $region48: #{tpu_custom_call.1} parent=31 // pred_fallthru
          _
        %v351 = vld [vmem:[#allocation2] sm:$0xff]
        %v352 = vld [vmem:[#allocation2 + $0x8] sm:$0xff]
        %v353 = vld [vmem:[#allocation2 + $0x10] sm:$0xff]
        %v354 = vld [vmem:[#allocation2 + $0x18] sm:$0xff]
        %v355 = vld [vmem:[#allocation2 + $0x20] sm:$0xff]
        %v356 = vld [vmem:[#allocation2 + $0x28] sm:$0xff]
        %v357 = vld [vmem:[#allocation2 + $0x30] sm:$0xff]
        %v358 = vld [vmem:[#allocation2 + $0x38] sm:$0xff]
        %v359 = vld [vmem:[#allocation2 + $0x40] sm:$0xff]
        %v360 = vld [vmem:[#allocation2 + $0x48] sm:$0xff]
        %v361 = vld [vmem:[#allocation2 + $0x50] sm:$0xff]
        %v362 = vld [vmem:[#allocation2 + $0x58] sm:$0xff]
        %v363 = vld [vmem:[#allocation2 + $0x60] sm:$0xff]
        %v364 = vld [vmem:[#allocation2 + $0x68] sm:$0xff]
        %v365 = vld [vmem:[#allocation2 + $0x70] sm:$0xff]
        %v366 = vld [vmem:[#allocation2 + $0x78] sm:$0xff]
        %v367 = vld [vmem:[#allocation2 + $0x80] sm:$0xff]
        %v368 = vld [vmem:[#allocation2 + $0x88] sm:$0xff]
        %v369 = vld [vmem:[#allocation2 + $0x90] sm:$0xff]
        %v370 = vld [vmem:[#allocation2 + $0x98] sm:$0xff]
        %v371 = vld [vmem:[#allocation2 + $0xa0] sm:$0xff]
        %v372 = vld [vmem:[#allocation2 + $0xa8] sm:$0xff]
        %v373 = vld [vmem:[#allocation2 + $0xb0] sm:$0xff]
        %v374 = vld [vmem:[#allocation2 + $0xb8] sm:$0xff]
        %v375 = vld [vmem:[#allocation2 + $0xc0] sm:$0xff]
        %v376 = vld [vmem:[#allocation2 + $0xc8] sm:$0xff]
        %v377 = vld [vmem:[#allocation2 + $0xd0] sm:$0xff]
        %v378 = vld [vmem:[#allocation2 + $0xd8] sm:$0xff]
        %v379 = vld [vmem:[#allocation2 + $0xe0] sm:$0xff]
        %v380 = vld [vmem:[#allocation2 + $0xe8] sm:$0xff]
        %v381 = vld [vmem:[#allocation2 + $0xf0] sm:$0xff]
        %v382 = vld [vmem:[#allocation2 + $0xf8] sm:$0xff]
        %v383 = vld [vmem:[#allocation2 + $0x100] sm:$0xff]
        %v384 = vld [vmem:[#allocation2 + $0x108] sm:$0xff]
        %v385 = vld [vmem:[#allocation2 + $0x110] sm:$0xff]
        %v386 = vld [vmem:[#allocation2 + $0x118] sm:$0xff]
        %v387 = vld [vmem:[#allocation2 + $0x120] sm:$0xff]
        %v388 = vld [vmem:[#allocation2 + $0x128] sm:$0xff]
        %v389 = vld [vmem:[#allocation2 + $0x130] sm:$0xff]
        %v390 = vld [vmem:[#allocation2 + $0x138] sm:$0xff]
        %v391 = vld [vmem:[#allocation2 + $0x140] sm:$0xff]
        %v392 = vld [vmem:[#allocation2 + $0x148] sm:$0xff]
        %v393 = vld [vmem:[#allocation2 + $0x150] sm:$0xff]
        %v394 = vld [vmem:[#allocation2 + $0x158] sm:$0xff]
        %v395 = vld [vmem:[#allocation2 + $0x160] sm:$0xff]
        %v396 = vld [vmem:[#allocation2 + $0x168] sm:$0xff]
        %v397 = vld [vmem:[#allocation2 + $0x170] sm:$0xff]
        %v398 = vld [vmem:[#allocation2 + $0x178] sm:$0xff]
        %v399 = vld [vmem:[#allocation2 + $0x180] sm:$0xff]
        %v400 = vld [vmem:[#allocation2 + $0x188] sm:$0xff]
        %v401 = vld [vmem:[#allocation2 + $0x190] sm:$0xff]
        %v402 = vld [vmem:[#allocation2 + $0x198] sm:$0xff]
        %v403 = vld [vmem:[#allocation2 + $0x1a0] sm:$0xff]
        %v404 = vld [vmem:[#allocation2 + $0x1a8] sm:$0xff]
        %v405 = vld [vmem:[#allocation2 + $0x1b0] sm:$0xff]
        %v406 = vld [vmem:[#allocation2 + $0x1b8] sm:$0xff]
        %v407 = vld [vmem:[#allocation2 + $0x1c0] sm:$0xff]
        %v408 = vld [vmem:[#allocation2 + $0x1c8] sm:$0xff]
        %v409 = vld [vmem:[#allocation2 + $0x1d0] sm:$0xff]
        %v410 = vld [vmem:[#allocation2 + $0x1d8] sm:$0xff]
        %v411 = vld [vmem:[#allocation2 + $0x1e0] sm:$0xff]
        %v412 = vld [vmem:[#allocation2 + $0x1e8] sm:$0xff]
        %v413 = vld [vmem:[#allocation2 + $0x1f0] sm:$0xff]
        %v414 = vld [vmem:[#allocation2 + $0x1f8] sm:$0xff]
        %v415 = vld [vmem:[#allocation3] sm:$0xf]
        %v416 = vld [vmem:[#allocation3 + $0x4] sm:$0xf]
        %v417 = vld [vmem:[#allocation3 + $0x8] sm:$0xf]
        %v418 = vld [vmem:[#allocation3 + $0xc] sm:$0xf]
        %v419 = vld [vmem:[#allocation3 + $0x10] sm:$0xf]
        %v420 = vld [vmem:[#allocation3 + $0x14] sm:$0xf]
        %v421 = vld [vmem:[#allocation3 + $0x18] sm:$0xf]
        %v422 = vld [vmem:[#allocation3 + $0x1c] sm:$0xf]
        %v423 = vld [vmem:[#allocation3 + $0x20] sm:$0xf]
        %v424 = vld [vmem:[#allocation3 + $0x24] sm:$0xf]
        %v425 = vld [vmem:[#allocation3 + $0x28] sm:$0xf]
        %v426 = vld [vmem:[#allocation3 + $0x2c] sm:$0xf]
        %v427 = vld [vmem:[#allocation3 + $0x30] sm:$0xf]
        %v428 = vld [vmem:[#allocation3 + $0x34] sm:$0xf]
        %v429 = vld [vmem:[#allocation3 + $0x38] sm:$0xf]
        %v430 = vld [vmem:[#allocation3 + $0x3c] sm:$0xf]
        %v431 = vld [vmem:[%s239] sm:$0xff]
        %v432 = vld [vmem:[%s239 + $0x8] sm:$0xff]
        %v433 = vld [vmem:[%s239 + $0x10] sm:$0xff]
        %v434 = vld [vmem:[%s239 + $0x18] sm:$0xff]
        %v435 = vld [vmem:[%s239 + $0x20] sm:$0xff]
        %v436 = vld [vmem:[%s239 + $0x28] sm:$0xff]
        %v437 = vld [vmem:[%s239 + $0x30] sm:$0xff]
        %v438 = vld [vmem:[%s239 + $0x38] sm:$0xff]
        %v439 = vld [vmem:[%s239 + $0x40] sm:$0xff]
        %v440 = vld [vmem:[%s239 + $0x48] sm:$0xff]
        %v441 = vld [vmem:[%s239 + $0x50] sm:$0xff]
        %v442 = vld [vmem:[%s239 + $0x58] sm:$0xff]
        %v443 = vld [vmem:[%s239 + $0x60] sm:$0xff]
        %v444 = vld [vmem:[%s239 + $0x68] sm:$0xff]
        %v445 = vld [vmem:[%s239 + $0x70] sm:$0xff]
        %v446 = vld [vmem:[%s239 + $0x78] sm:$0xff]
        %v447 = vld [vmem:[%s239 + $0x80] sm:$0xff]
        %v448 = vld [vmem:[%s239 + $0x88] sm:$0xff]
        %v449 = vld [vmem:[%s239 + $0x90] sm:$0xff]
        %v450 = vld [vmem:[%s239 + $0x98] sm:$0xff]
        %v451 = vld [vmem:[%s239 + $0xa0] sm:$0xff]
        %v452 = vld [vmem:[%s239 + $0xa8] sm:$0xff]
        %v453 = vld [vmem:[%s239 + $0xb0] sm:$0xff]
        %v454 = vld [vmem:[%s239 + $0xb8] sm:$0xff]
        %v455 = vld [vmem:[%s239 + $0xc0] sm:$0xff]
        %v456 = vld [vmem:[%s239 + $0xc8] sm:$0xff]
        %v457 = vld [vmem:[%s239 + $0xd0] sm:$0xff]
        %v458 = vld [vmem:[%s239 + $0xd8] sm:$0xff]
        %v459 = vld [vmem:[%s239 + $0xe0] sm:$0xff]
        %v460 = vld [vmem:[%s239 + $0xe8] sm:$0xff]
        %v461 = vld [vmem:[%s239 + $0xf0] sm:$0xff]
        %v462 = vld [vmem:[%s239 + $0xf8] sm:$0xff]
        %v479 = vunpack.c.l.b16 %v415
        %v480 = vunpack.c.l.b16 %v416
        %v481 = vunpack.c.l.b16 %v417
        %v482 = vunpack.c.l.b16 %v418
        %v483 = vunpack.c.l.b16 %v419
        %v484 = vunpack.c.l.b16 %v420
        %v485 = vunpack.c.l.b16 %v421
        %v486 = vunpack.c.l.b16 %v422
        %v487 = vunpack.c.l.b16 %v423
        %v488 = vunpack.c.l.b16 %v424
        %v489 = vunpack.c.l.b16 %v425
        %v490 = vunpack.c.l.b16 %v426
        %v491 = vunpack.c.l.b16 %v427
        %v492 = vunpack.c.l.b16 %v428
        %v493 = vunpack.c.l.b16 %v429
        %v494 = vunpack.c.l.b16 %v430
        %v495 = vpack.c.b16 %v480, %v479
        %v496 = vpack.c.b16 %v482, %v481
        %v497 = vpack.c.b16 %v484, %v483
        %v498 = vpack.c.b16 %v486, %v485
        %v499 = vpack.c.b16 %v488, %v487
        %v500 = vpack.c.b16 %v490, %v489
        %v501 = vpack.c.b16 %v492, %v491
        %v502 = vpack.c.b16 %v494, %v493
        %v543 = vunpack.c.l.b16 %v431
        %v544 = vunpack.c.h.b16 %v431
        %v545 = vunpack.c.l.b16 %v432
        %v546 = vunpack.c.h.b16 %v432
        %v547 = vunpack.c.l.b16 %v433
        %v548 = vunpack.c.h.b16 %v433
        %v549 = vunpack.c.l.b16 %v434
        %v550 = vunpack.c.h.b16 %v434
        %v551 = vunpack.c.l.b16 %v435
        %v552 = vunpack.c.h.b16 %v435
        %v553 = vunpack.c.l.b16 %v436
        %v554 = vunpack.c.h.b16 %v436
        %v555 = vunpack.c.l.b16 %v437
        %v556 = vunpack.c.h.b16 %v437
        %v557 = vunpack.c.l.b16 %v438
        %v558 = vunpack.c.h.b16 %v438
        %v559 = vunpack.c.l.b16 %v439
        %v560 = vunpack.c.h.b16 %v439
        %v561 = vunpack.c.l.b16 %v440
        %v562 = vunpack.c.h.b16 %v440
        %v563 = vunpack.c.l.b16 %v441
        %v564 = vunpack.c.h.b16 %v441
        %v565 = vunpack.c.l.b16 %v442
        %v566 = vunpack.c.h.b16 %v442
        %v567 = vunpack.c.l.b16 %v443
        %v568 = vunpack.c.h.b16 %v443
        %v569 = vunpack.c.l.b16 %v444
        %v570 = vunpack.c.h.b16 %v444
        %v571 = vunpack.c.l.b16 %v445
        %v572 = vunpack.c.h.b16 %v445
        %v573 = vunpack.c.l.b16 %v446
        %v574 = vunpack.c.h.b16 %v446
        %v575 = vunpack.c.l.b16 %v447
        %v576 = vunpack.c.h.b16 %v447
        %v577 = vunpack.c.l.b16 %v448
        %v578 = vunpack.c.h.b16 %v448
        %v579 = vunpack.c.l.b16 %v449
        %v580 = vunpack.c.h.b16 %v449
        %v581 = vunpack.c.l.b16 %v450
        %v582 = vunpack.c.h.b16 %v450
        %v583 = vunpack.c.l.b16 %v451
        %v584 = vunpack.c.h.b16 %v451
        %v585 = vunpack.c.l.b16 %v452
        %v586 = vunpack.c.h.b16 %v452
        %v587 = vunpack.c.l.b16 %v453
        %v588 = vunpack.c.h.b16 %v453
        %v589 = vunpack.c.l.b16 %v454
        %v590 = vunpack.c.h.b16 %v454
        %v591 = vunpack.c.l.b16 %v455
        %v592 = vunpack.c.h.b16 %v455
        %v593 = vunpack.c.l.b16 %v456
        %v594 = vunpack.c.h.b16 %v456
        %v595 = vunpack.c.l.b16 %v457
        %v596 = vunpack.c.h.b16 %v457
        %v597 = vunpack.c.l.b16 %v458
        %v598 = vunpack.c.h.b16 %v458
        %v599 = vunpack.c.l.b16 %v459
        %v600 = vunpack.c.h.b16 %v459
        %v601 = vunpack.c.l.b16 %v460
        %v602 = vunpack.c.h.b16 %v460
        %v603 = vunpack.c.l.b16 %v461
        %v604 = vunpack.c.h.b16 %v461
        %v605 = vunpack.c.l.b16 %v462
        %v606 = vunpack.c.h.b16 %v462
        %v607 = vpack.c.b16 %v547, %v543
        %v608 = vpack.c.b16 %v548, %v544
        %v609 = vpack.c.b16 %v549, %v545
        %v610 = vpack.c.b16 %v550, %v546
        %v611 = vpack.c.b16 %v555, %v551
        %v612 = vpack.c.b16 %v556, %v552
        %v613 = vpack.c.b16 %v557, %v553
        %v614 = vpack.c.b16 %v558, %v554
        %v615 = vpack.c.b16 %v563, %v559
        %v616 = vpack.c.b16 %v564, %v560
        %v617 = vpack.c.b16 %v565, %v561
        %v618 = vpack.c.b16 %v566, %v562
        %v619 = vpack.c.b16 %v571, %v567
        %v620 = vpack.c.b16 %v572, %v568
        %v621 = vpack.c.b16 %v573, %v569
        %v622 = vpack.c.b16 %v574, %v570
        %v623 = vpack.c.b16 %v579, %v575
        %v624 = vpack.c.b16 %v580, %v576
        %v625 = vpack.c.b16 %v581, %v577
        %v626 = vpack.c.b16 %v582, %v578
        %v627 = vpack.c.b16 %v587, %v583
        %v628 = vpack.c.b16 %v588, %v584
        %v629 = vpack.c.b16 %v589, %v585
        %v630 = vpack.c.b16 %v590, %v586
        %v631 = vpack.c.b16 %v595, %v591
        %v632 = vpack.c.b16 %v596, %v592
        %v633 = vpack.c.b16 %v597, %v593
        %v634 = vpack.c.b16 %v598, %v594
        %v635 = vpack.c.b16 %v603, %v599
        %v636 = vpack.c.b16 %v604, %v600
        %v637 = vpack.c.b16 %v605, %v601
        %v638 = vpack.c.b16 %v606, %v602
        %671 = vmatprep.subr.bf16.mxu0 %v608
        %672 = vmatpush1.bf16.msra.mxu0 %v607
        %673 = vmatprep.subr.bf16.mxu0 %v612
        %674 = vmatpush1.bf16.msra.mxu0 %v611
        %675 = vmatprep.subr.bf16.mxu0 %v616
        %676 = vmatpush1.bf16.msra.mxu0 %v615
        %677 = vmatprep.subr.bf16.mxu0 %v620
        %678 = vmatpush1.bf16.msra.mxu0 %v619
        %679 = vmatprep.subr.bf16.mxu0 %v624
        %680 = vmatpush1.bf16.msra.mxu0 %v623
        %681 = vmatprep.subr.bf16.mxu0 %v628
        %682 = vmatpush1.bf16.msra.mxu0 %v627
        %683 = vmatprep.subr.bf16.mxu0 %v632
        %684 = vmatpush1.bf16.msra.mxu0 %v631
        %685 = vmatprep.subr.bf16.mxu0 %v636
        %686 = vmatpush1.bf16.msra.mxu0 %v635
        %687 = vmatprep.subr.bf16.mxu0 0
        %688 = vmatpush1.bf16.msra.mxu0 0
        %689 = vmatprep.subr.bf16.mxu0 0
        %690 = vmatpush1.bf16.msra.mxu0 0
        %691 = vmatprep.subr.bf16.mxu0 0
        %692 = vmatpush1.bf16.msra.mxu0 0
        %693 = vmatprep.subr.bf16.mxu0 0
        %694 = vmatpush1.bf16.msra.mxu0 0
        %695 = vmatprep.subr.bf16.mxu0 0
        %696 = vmatpush1.bf16.msra.mxu0 0
        %697 = vmatprep.subr.bf16.mxu0 0
        %698 = vmatpush1.bf16.msra.mxu0 0
        %699 = vmatprep.subr.bf16.mxu0 0
        %700 = vmatpush1.bf16.msra.mxu0 0
        %701 = vmatprep.subr.bf16.mxu0 0
        %702 = vmatpush1.bf16.msra.mxu0 0
        %703 = vmatprep.mubr.bf16.mxu0 0
        %704 = vmatmul.mubr.bf16.gmra.mrb[0].mxu0 %v495
        %v705 = vpop.f32.mrb[0].mxu0
        %v706 = vadd.f32 0.0, %v705
        %v707 = vpop.f32.mrb[0].mxu0
        %v708 = vadd.f32 0.0, %v707
        %v709 = vpop.f32.mrb[0].mxu0
        %v710 = vadd.f32 0.0, %v709
        %v711 = vpop.f32.mrb[0].mxu0
        %v712 = vadd.f32 0.0, %v711
        %713 = vmatprep.mubr.bf16.mxu0 0
        %714 = vmatmul.mubr.bf16.gmra.mrb[0].mxu0 %v496
        %v715 = vpop.f32.mrb[0].mxu0
        %v716 = vadd.f32 0.0, %v715
        %v717 = vpop.f32.mrb[0].mxu0
        %v718 = vadd.f32 0.0, %v717
        %v719 = vpop.f32.mrb[0].mxu0
        %v720 = vadd.f32 0.0, %v719
        %v721 = vpop.f32.mrb[0].mxu0
        %v722 = vadd.f32 0.0, %v721
        %723 = vmatprep.mubr.bf16.mxu0 0
        %724 = vmatmul.mubr.bf16.gmra.mrb[0].mxu0 %v497
        %v725 = vpop.f32.mrb[0].mxu0
        %v726 = vadd.f32 0.0, %v725
        %v727 = vpop.f32.mrb[0].mxu0
        %v728 = vadd.f32 0.0, %v727
        %v729 = vpop.f32.mrb[0].mxu0
        %v730 = vadd.f32 0.0, %v729
        %v731 = vpop.f32.mrb[0].mxu0
        %v732 = vadd.f32 0.0, %v731
        %733 = vmatprep.mubr.bf16.mxu0 0
        %734 = vmatmul.mubr.bf16.gmra.mrb[0].mxu0 %v498
        %v735 = vpop.f32.mrb[0].mxu0
        %v736 = vadd.f32 0.0, %v735
        %v737 = vpop.f32.mrb[0].mxu0
        %v738 = vadd.f32 0.0, %v737
        %v739 = vpop.f32.mrb[0].mxu0
        %v740 = vadd.f32 0.0, %v739
        %v741 = vpop.f32.mrb[0].mxu0
        %v742 = vadd.f32 0.0, %v741
        %743 = vmatprep.mubr.bf16.mxu0 0
        %744 = vmatmul.mubr.bf16.gmra.mrb[0].mxu0 %v499
        %v745 = vpop.f32.mrb[0].mxu0
        %v746 = vadd.f32 0.0, %v745
        %v747 = vpop.f32.mrb[0].mxu0
        %v748 = vadd.f32 0.0, %v747
        %v749 = vpop.f32.mrb[0].mxu0
        %v750 = vadd.f32 0.0, %v749
        %v751 = vpop.f32.mrb[0].mxu0
        %v752 = vadd.f32 0.0, %v751
        %753 = vmatprep.mubr.bf16.mxu0 0
        %754 = vmatmul.mubr.bf16.gmra.mrb[0].mxu0 %v500
        %v755 = vpop.f32.mrb[0].mxu0
        %v756 = vadd.f32 0.0, %v755
        %v757 = vpop.f32.mrb[0].mxu0
        %v758 = vadd.f32 0.0, %v757
        %v759 = vpop.f32.mrb[0].mxu0
        %v760 = vadd.f32 0.0, %v759
        %v761 = vpop.f32.mrb[0].mxu0
        %v762 = vadd.f32 0.0, %v761
        %763 = vmatprep.mubr.bf16.mxu0 0
        %764 = vmatmul.mubr.bf16.gmra.mrb[0].mxu0 %v501
        %v765 = vpop.f32.mrb[0].mxu0
        %v766 = vadd.f32 0.0, %v765
        %v767 = vpop.f32.mrb[0].mxu0
        %v768 = vadd.f32 0.0, %v767
        %v769 = vpop.f32.mrb[0].mxu0
        %v770 = vadd.f32 0.0, %v769
        %v771 = vpop.f32.mrb[0].mxu0
        %v772 = vadd.f32 0.0, %v771
        %773 = vmatprep.mubr.bf16.mxu0 0
        %774 = vmatmul.mubr.bf16.gmra.mrb[0].mxu0 %v502
        %v775 = vpop.f32.mrb[0].mxu0
        %v776 = vadd.f32 0.0, %v775
        %v777 = vpop.f32.mrb[0].mxu0
        %v778 = vadd.f32 0.0, %v777
        %v779 = vpop.f32.mrb[0].mxu0
        %v780 = vadd.f32 0.0, %v779
        %v781 = vpop.f32.mrb[0].mxu0
        %v782 = vadd.f32 0.0, %v781
        %783 = vdwg.mxu0
        %784 = vmatprep.subr.bf16.mxu0 %v610
        %785 = vmatpush1.bf16.msra.mxu0 %v609
        %786 = vmatprep.subr.bf16.mxu0 %v614
        %787 = vmatpush1.bf16.msra.mxu0 %v613
        %788 = vmatprep.subr.bf16.mxu0 %v618
        %789 = vmatpush1.bf16.msra.mxu0 %v617
        %790 = vmatprep.subr.bf16.mxu0 %v622
        %791 = vmatpush1.bf16.msra.mxu0 %v621
        %792 = vmatprep.subr.bf16.mxu0 %v626
        %793 = vmatpush1.bf16.msra.mxu0 %v625
        %794 = vmatprep.subr.bf16.mxu0 %v630
        %795 = vmatpush1.bf16.msra.mxu0 %v629
        %796 = vmatprep.subr.bf16.mxu0 %v634
        %797 = vmatpush1.bf16.msra.mxu0 %v633
        %798 = vmatprep.subr.bf16.mxu0 %v638
        %799 = vmatpush1.bf16.msra.mxu0 %v637
        %800 = vmatprep.subr.bf16.mxu0 0
        %801 = vmatpush1.bf16.msra.mxu0 0
        %802 = vmatprep.subr.bf16.mxu0 0
        %803 = vmatpush1.bf16.msra.mxu0 0
        %804 = vmatprep.subr.bf16.mxu0 0
        %805 = vmatpush1.bf16.msra.mxu0 0
        %806 = vmatprep.subr.bf16.mxu0 0
        %807 = vmatpush1.bf16.msra.mxu0 0
        %808 = vmatprep.subr.bf16.mxu0 0
        %809 = vmatpush1.bf16.msra.mxu0 0
        %810 = vmatprep.subr.bf16.mxu0 0
        %811 = vmatpush1.bf16.msra.mxu0 0
        %812 = vmatprep.subr.bf16.mxu0 0
        %813 = vmatpush1.bf16.msra.mxu0 0
        %814 = vmatprep.subr.bf16.mxu0 0
        %815 = vmatpush1.bf16.msra.mxu0 0
        %816 = vmatprep.mubr.bf16.mxu0 0
        %817 = vmatmul.mubr.bf16.gmra.mrb[0].mxu0 %v495
        %v818 = vpop.f32.mrb[0].mxu0
        %v819 = vadd.f32 0.0, %v818
        %v820 = vpop.f32.mrb[0].mxu0
        %v821 = vadd.f32 0.0, %v820
        %v822 = vpop.f32.mrb[0].mxu0
        %v823 = vadd.f32 0.0, %v822
        %v824 = vpop.f32.mrb[0].mxu0
        %v825 = vadd.f32 0.0, %v824
        %826 = vmatprep.mubr.bf16.mxu0 0
        %827 = vmatmul.mubr.bf16.gmra.mrb[0].mxu0 %v496
        %v828 = vpop.f32.mrb[0].mxu0
        %v829 = vadd.f32 0.0, %v828
        %v830 = vpop.f32.mrb[0].mxu0
        %v831 = vadd.f32 0.0, %v830
        %v832 = vpop.f32.mrb[0].mxu0
        %v833 = vadd.f32 0.0, %v832
        %v834 = vpop.f32.mrb[0].mxu0
        %v835 = vadd.f32 0.0, %v834
        %836 = vmatprep.mubr.bf16.mxu0 0
        %837 = vmatmul.mubr.bf16.gmra.mrb[0].mxu0 %v497
        %v838 = vpop.f32.mrb[0].mxu0
        %v839 = vadd.f32 0.0, %v838
        %v840 = vpop.f32.mrb[0].mxu0
        %v841 = vadd.f32 0.0, %v840
        %v842 = vpop.f32.mrb[0].mxu0
        %v843 = vadd.f32 0.0, %v842
        %v844 = vpop.f32.mrb[0].mxu0
        %v845 = vadd.f32 0.0, %v844
        %846 = vmatprep.mubr.bf16.mxu0 0
        %847 = vmatmul.mubr.bf16.gmra.mrb[0].mxu0 %v498
        %v848 = vpop.f32.mrb[0].mxu0
        %v849 = vadd.f32 0.0, %v848
        %v850 = vpop.f32.mrb[0].mxu0
        %v851 = vadd.f32 0.0, %v850
        %v852 = vpop.f32.mrb[0].mxu0
        %v853 = vadd.f32 0.0, %v852
        %v854 = vpop.f32.mrb[0].mxu0
        %v855 = vadd.f32 0.0, %v854
        %856 = vmatprep.mubr.bf16.mxu0 0
        %857 = vmatmul.mubr.bf16.gmra.mrb[0].mxu0 %v499
        %v858 = vpop.f32.mrb[0].mxu0
        %v859 = vadd.f32 0.0, %v858
        %v860 = vpop.f32.mrb[0].mxu0
        %v861 = vadd.f32 0.0, %v860
        %v862 = vpop.f32.mrb[0].mxu0
        %v863 = vadd.f32 0.0, %v862
        %v864 = vpop.f32.mrb[0].mxu0
        %v865 = vadd.f32 0.0, %v864
        %866 = vmatprep.mubr.bf16.mxu0 0
        %867 = vmatmul.mubr.bf16.gmra.mrb[0].mxu0 %v500
        %v868 = vpop.f32.mrb[0].mxu0
        %v869 = vadd.f32 0.0, %v868
        %v870 = vpop.f32.mrb[0].mxu0
        %v871 = vadd.f32 0.0, %v870
        %v872 = vpop.f32.mrb[0].mxu0
        %v873 = vadd.f32 0.0, %v872
        %v874 = vpop.f32.mrb[0].mxu0
        %v875 = vadd.f32 0.0, %v874
        %876 = vmatprep.mubr.bf16.mxu0 0
        %877 = vmatmul.mubr.bf16.gmra.mrb[0].mxu0 %v501
        %v878 = vpop.f32.mrb[0].mxu0
        %v879 = vadd.f32 0.0, %v878
        %v880 = vpop.f32.mrb[0].mxu0
        %v881 = vadd.f32 0.0, %v880
        %v882 = vpop.f32.mrb[0].mxu0
        %v883 = vadd.f32 0.0, %v882
        %v884 = vpop.f32.mrb[0].mxu0
        %v885 = vadd.f32 0.0, %v884
        %886 = vmatprep.mubr.bf16.mxu0 0
        %887 = vmatmul.mubr.bf16.gmra.mrb[0].mxu0 %v502
        %v888 = vpop.f32.mrb[0].mxu0
        %v889 = vadd.f32 0.0, %v888
        %v890 = vpop.f32.mrb[0].mxu0
        %v891 = vadd.f32 0.0, %v890
        %v892 = vpop.f32.mrb[0].mxu0
        %v893 = vadd.f32 0.0, %v892
        %v894 = vpop.f32.mrb[0].mxu0
        %v895 = vadd.f32 0.0, %v894
        %896 = vdwg.mxu0
        %v897 = vadd.f32 %v351, %v706
        %v898 = vadd.f32 %v352, %v708
        %v899 = vadd.f32 %v353, %v819
        %v900 = vadd.f32 %v354, %v821
        %v901 = vadd.f32 %v355, %v710
        %v902 = vadd.f32 %v356, %v712
        %v903 = vadd.f32 %v357, %v823
        %v904 = vadd.f32 %v358, %v825
        %v905 = vadd.f32 %v359, %v716
        %v906 = vadd.f32 %v360, %v718
        %v907 = vadd.f32 %v361, %v829
        %v908 = vadd.f32 %v362, %v831
        %v909 = vadd.f32 %v363, %v720
        %v910 = vadd.f32 %v364, %v722
        %v911 = vadd.f32 %v365, %v833
        %v912 = vadd.f32 %v366, %v835
        %v913 = vadd.f32 %v367, %v726
        %v914 = vadd.f32 %v368, %v728
        %v915 = vadd.f32 %v369, %v839
        %v916 = vadd.f32 %v370, %v841
        %v917 = vadd.f32 %v371, %v730
        %v918 = vadd.f32 %v372, %v732
        %v919 = vadd.f32 %v373, %v843
        %v920 = vadd.f32 %v374, %v845
        %v921 = vadd.f32 %v375, %v736
        %v922 = vadd.f32 %v376, %v738
        %v923 = vadd.f32 %v377, %v849
        %v924 = vadd.f32 %v378, %v851
        %v925 = vadd.f32 %v379, %v740
        %v926 = vadd.f32 %v380, %v742
        %v927 = vadd.f32 %v381, %v853
        %v928 = vadd.f32 %v382, %v855
        %v929 = vadd.f32 %v383, %v746
        %v930 = vadd.f32 %v384, %v748
        %v931 = vadd.f32 %v385, %v859
        %v932 = vadd.f32 %v386, %v861
        %v933 = vadd.f32 %v387, %v750
        %v934 = vadd.f32 %v388, %v752
        %v935 = vadd.f32 %v389, %v863
        %v936 = vadd.f32 %v390, %v865
        %v937 = vadd.f32 %v391, %v756
        %v938 = vadd.f32 %v392, %v758
        %v939 = vadd.f32 %v393, %v869
        %v940 = vadd.f32 %v394, %v871
        %v941 = vadd.f32 %v395, %v760
        %v942 = vadd.f32 %v396, %v762
        %v943 = vadd.f32 %v397, %v873
        %v944 = vadd.f32 %v398, %v875
        %v945 = vadd.f32 %v399, %v766
        %v946 = vadd.f32 %v400, %v768
        %v947 = vadd.f32 %v401, %v879
        %v948 = vadd.f32 %v402, %v881
        %v949 = vadd.f32 %v403, %v770
        %v950 = vadd.f32 %v404, %v772
        %v951 = vadd.f32 %v405, %v883
        %v952 = vadd.f32 %v406, %v885
        %v953 = vadd.f32 %v407, %v776
        %v954 = vadd.f32 %v408, %v778
        %v955 = vadd.f32 %v409, %v889
        %v956 = vadd.f32 %v410, %v891
        %v957 = vadd.f32 %v411, %v780
        %v958 = vadd.f32 %v412, %v782
        %v959 = vadd.f32 %v413, %v893
        %v960 = vadd.f32 %v414, %v895
        %961 = vst [vmem:[#allocation2] sm:$0xff] %v897
        %962 = vst [vmem:[#allocation2 + $0x8] sm:$0xff] %v898
        %963 = vst [vmem:[#allocation2 + $0x10] sm:$0xff] %v899
        %964 = vst [vmem:[#allocation2 + $0x18] sm:$0xff] %v900
        %965 = vst [vmem:[#allocation2 + $0x20] sm:$0xff] %v901
        %966 = vst [vmem:[#allocation2 + $0x28] sm:$0xff] %v902
        %967 = vst [vmem:[#allocation2 + $0x30] sm:$0xff] %v903
        %968 = vst [vmem:[#allocation2 + $0x38] sm:$0xff] %v904
        %969 = vst [vmem:[#allocation2 + $0x40] sm:$0xff] %v905
        %970 = vst [vmem:[#allocation2 + $0x48] sm:$0xff] %v906
        %971 = vst [vmem:[#allocation2 + $0x50] sm:$0xff] %v907
        %972 = vst [vmem:[#allocation2 + $0x58] sm:$0xff] %v908
        %973 = vst [vmem:[#allocation2 + $0x60] sm:$0xff] %v909
        %974 = vst [vmem:[#allocation2 + $0x68] sm:$0xff] %v910
        %975 = vst [vmem:[#allocation2 + $0x70] sm:$0xff] %v911
        %976 = vst [vmem:[#allocation2 + $0x78] sm:$0xff] %v912
        %977 = vst [vmem:[#allocation2 + $0x80] sm:$0xff] %v913
        %978 = vst [vmem:[#allocation2 + $0x88] sm:$0xff] %v914
        %979 = vst [vmem:[#allocation2 + $0x90] sm:$0xff] %v915
        %980 = vst [vmem:[#allocation2 + $0x98] sm:$0xff] %v916
        %981 = vst [vmem:[#allocation2 + $0xa0] sm:$0xff] %v917
        %982 = vst [vmem:[#allocation2 + $0xa8] sm:$0xff] %v918
        %983 = vst [vmem:[#allocation2 + $0xb0] sm:$0xff] %v919
        %984 = vst [vmem:[#allocation2 + $0xb8] sm:$0xff] %v920
        %985 = vst [vmem:[#allocation2 + $0xc0] sm:$0xff] %v921
        %986 = vst [vmem:[#allocation2 + $0xc8] sm:$0xff] %v922
        %987 = vst [vmem:[#allocation2 + $0xd0] sm:$0xff] %v923
        %988 = vst [vmem:[#allocation2 + $0xd8] sm:$0xff] %v924
        %989 = vst [vmem:[#allocation2 + $0xe0] sm:$0xff] %v925
        %990 = vst [vmem:[#allocation2 + $0xe8] sm:$0xff] %v926
        %991 = vst [vmem:[#allocation2 + $0xf0] sm:$0xff] %v927
        %992 = vst [vmem:[#allocation2 + $0xf8] sm:$0xff] %v928
        %993 = vst [vmem:[#allocation2 + $0x100] sm:$0xff] %v929
        %994 = vst [vmem:[#allocation2 + $0x108] sm:$0xff] %v930
        %995 = vst [vmem:[#allocation2 + $0x110] sm:$0xff] %v931
        %996 = vst [vmem:[#allocation2 + $0x118] sm:$0xff] %v932
        %997 = vst [vmem:[#allocation2 + $0x120] sm:$0xff] %v933
        %998 = vst [vmem:[#allocation2 + $0x128] sm:$0xff] %v934
        %999 = vst [vmem:[#allocation2 + $0x130] sm:$0xff] %v935
        %1000 = vst [vmem:[#allocation2 + $0x138] sm:$0xff] %v936
        %1001 = vst [vmem:[#allocation2 + $0x140] sm:$0xff] %v937
        %1002 = vst [vmem:[#allocation2 + $0x148] sm:$0xff] %v938
        %1003 = vst [vmem:[#allocation2 + $0x150] sm:$0xff] %v939
        %1004 = vst [vmem:[#allocation2 + $0x158] sm:$0xff] %v940
        %1005 = vst [vmem:[#allocation2 + $0x160] sm:$0xff] %v941
        %1006 = vst [vmem:[#allocation2 + $0x168] sm:$0xff] %v942
        %1007 = vst [vmem:[#allocation2 + $0x170] sm:$0xff] %v943
        %1008 = vst [vmem:[#allocation2 + $0x178] sm:$0xff] %v944
        %1009 = vst [vmem:[#allocation2 + $0x180] sm:$0xff] %v945
        %1010 = vst [vmem:[#allocation2 + $0x188] sm:$0xff] %v946
        %1011 = vst [vmem:[#allocation2 + $0x190] sm:$0xff] %v947
        %1012 = vst [vmem:[#allocation2 + $0x198] sm:$0xff] %v948
        %1013 = vst [vmem:[#allocation2 + $0x1a0] sm:$0xff] %v949
        %1014 = vst [vmem:[#allocation2 + $0x1a8] sm:$0xff] %v950
        %1015 = vst [vmem:[#allocation2 + $0x1b0] sm:$0xff] %v951
        %1016 = vst [vmem:[#allocation2 + $0x1b8] sm:$0xff] %v952
        %1017 = vst [vmem:[#allocation2 + $0x1c0] sm:$0xff] %v953
        %1018 = vst [vmem:[#allocation2 + $0x1c8] sm:$0xff] %v954
        %1019 = vst [vmem:[#allocation2 + $0x1d0] sm:$0xff] %v955
        %1020 = vst [vmem:[#allocation2 + $0x1d8] sm:$0xff] %v956
        %1021 = vst [vmem:[#allocation2 + $0x1e0] sm:$0xff] %v957
        %1022 = vst [vmem:[#allocation2 + $0x1e8] sm:$0xff] %v958
        %1023 = vst [vmem:[#allocation2 + $0x1f0] sm:$0xff] %v959
        %1024 = vst [vmem:[#allocation2 + $0x1f8] sm:$0xff] %v960
        // Predicated region
        $region49: #{tpu_custom_call.1} parent=31 // pred_check
          %p1025 = pneg %p283
        $region50: #{tpu_custom_call.1} parent=31 // pred_check_branch
          %1027 = sbr.rel (%p1025) target = $region52
        $region51: #{tpu_custom_call.1} parent=31 // pred_region
          %v1028 = vld [vmem:[#allocation2] sm:$0xff]
          %v1029 = vld [vmem:[#allocation2 + $0x8] sm:$0xff]
          %v1030 = vld [vmem:[#allocation2 + $0x10] sm:$0xff]
          %v1031 = vld [vmem:[#allocation2 + $0x18] sm:$0xff]
          %v1032 = vld [vmem:[#allocation2 + $0x20] sm:$0xff]
          %v1033 = vld [vmem:[#allocation2 + $0x28] sm:$0xff]
          %v1034 = vld [vmem:[#allocation2 + $0x30] sm:$0xff]
          %v1035 = vld [vmem:[#allocation2 + $0x38] sm:$0xff]
          %v1036 = vld [vmem:[#allocation2 + $0x40] sm:$0xff]
          %v1037 = vld [vmem:[#allocation2 + $0x48] sm:$0xff]
          %v1038 = vld [vmem:[#allocation2 + $0x50] sm:$0xff]
          %v1039 = vld [vmem:[#allocation2 + $0x58] sm:$0xff]
          %v1040 = vld [vmem:[#allocation2 + $0x60] sm:$0xff]
          %v1041 = vld [vmem:[#allocation2 + $0x68] sm:$0xff]
          %v1042 = vld [vmem:[#allocation2 + $0x70] sm:$0xff]
          %v1043 = vld [vmem:[#allocation2 + $0x78] sm:$0xff]
          %v1044 = vld [vmem:[#allocation2 + $0x80] sm:$0xff]
          %v1045 = vld [vmem:[#allocation2 + $0x88] sm:$0xff]
          %v1046 = vld [vmem:[#allocation2 + $0x90] sm:$0xff]
          %v1047 = vld [vmem:[#allocation2 + $0x98] sm:$0xff]
          %v1048 = vld [vmem:[#allocation2 + $0xa0] sm:$0xff]
          %v1049 = vld [vmem:[#allocation2 + $0xa8] sm:$0xff]
          %v1050 = vld [vmem:[#allocation2 + $0xb0] sm:$0xff]
          %v1051 = vld [vmem:[#allocation2 + $0xb8] sm:$0xff]
          %v1052 = vld [vmem:[#allocation2 + $0xc0] sm:$0xff]
          %v1053 = vld [vmem:[#allocation2 + $0xc8] sm:$0xff]
          %v1054 = vld [vmem:[#allocation2 + $0xd0] sm:$0xff]
          %v1055 = vld [vmem:[#allocation2 + $0xd8] sm:$0xff]
          %v1056 = vld [vmem:[#allocation2 + $0xe0] sm:$0xff]
          %v1057 = vld [vmem:[#allocation2 + $0xe8] sm:$0xff]
          %v1058 = vld [vmem:[#allocation2 + $0xf0] sm:$0xff]
          %v1059 = vld [vmem:[#allocation2 + $0xf8] sm:$0xff]
          %v1060 = vld [vmem:[#allocation2 + $0x100] sm:$0xff]
          %v1061 = vld [vmem:[#allocation2 + $0x108] sm:$0xff]
          %v1062 = vld [vmem:[#allocation2 + $0x110] sm:$0xff]
          %v1063 = vld [vmem:[#allocation2 + $0x118] sm:$0xff]
          %v1064 = vld [vmem:[#allocation2 + $0x120] sm:$0xff]
          %v1065 = vld [vmem:[#allocation2 + $0x128] sm:$0xff]
          %v1066 = vld [vmem:[#allocation2 + $0x130] sm:$0xff]
          %v1067 = vld [vmem:[#allocation2 + $0x138] sm:$0xff]
          %v1068 = vld [vmem:[#allocation2 + $0x140] sm:$0xff]
          %v1069 = vld [vmem:[#allocation2 + $0x148] sm:$0xff]
          %v1070 = vld [vmem:[#allocation2 + $0x150] sm:$0xff]
          %v1071 = vld [vmem:[#allocation2 + $0x158] sm:$0xff]
          %v1072 = vld [vmem:[#allocation2 + $0x160] sm:$0xff]
          %v1073 = vld [vmem:[#allocation2 + $0x168] sm:$0xff]
          %v1074 = vld [vmem:[#allocation2 + $0x170] sm:$0xff]
          %v1075 = vld [vmem:[#allocation2 + $0x178] sm:$0xff]
          %v1076 = vld [vmem:[#allocation2 + $0x180] sm:$0xff]
          %v1077 = vld [vmem:[#allocation2 + $0x188] sm:$0xff]
          %v1078 = vld [vmem:[#allocation2 + $0x190] sm:$0xff]
          %v1079 = vld [vmem:[#allocation2 + $0x198] sm:$0xff]
          %v1080 = vld [vmem:[#allocation2 + $0x1a0] sm:$0xff]
          %v1081 = vld [vmem:[#allocation2 + $0x1a8] sm:$0xff]
          %v1082 = vld [vmem:[#allocation2 + $0x1b0] sm:$0xff]
          %v1083 = vld [vmem:[#allocation2 + $0x1b8] sm:$0xff]
          %v1084 = vld [vmem:[#allocation2 + $0x1c0] sm:$0xff]
          %v1085 = vld [vmem:[#allocation2 + $0x1c8] sm:$0xff]
          %v1086 = vld [vmem:[#allocation2 + $0x1d0] sm:$0xff]
          %v1087 = vld [vmem:[#allocation2 + $0x1d8] sm:$0xff]
          %v1088 = vld [vmem:[#allocation2 + $0x1e0] sm:$0xff]
          %v1089 = vld [vmem:[#allocation2 + $0x1e8] sm:$0xff]
          %v1090 = vld [vmem:[#allocation2 + $0x1f0] sm:$0xff]
          %v1091 = vld [vmem:[#allocation2 + $0x1f8] sm:$0xff]
          %v1092 = vld [vmem:[%s248] sm:$0xf]
          %v1094 = vlaneseq
          %v1095 = vshrl.u32 %v1094, 7
          %v1096 = vsub.s32 0, %v1095
          %v1097 = vrot.slane %v1092, %v1096
          %v1098 = vlaneseq
          %v1099 = vshrl.u32 %v1098, 7
          %v1100 = vsub.s32 1, %v1099
          %v1101 = vrot.slane %v1092, %v1100
          %v1102 = vlaneseq
          %v1103 = vshrl.u32 %v1102, 7
          %v1104 = vsub.s32 2, %v1103
          %v1105 = vrot.slane %v1092, %v1104
          %v1106 = vlaneseq
          %v1107 = vshrl.u32 %v1106, 7
          %v1108 = vsub.s32 3, %v1107
          %v1109 = vrot.slane %v1092, %v1108
          %v1114 = vadd.f32 %v1028, %v1097
          %v1115 = vadd.f32 %v1029, %v1101
          %v1116 = vadd.f32 %v1030, %v1105
          %v1117 = vadd.f32 %v1031, %v1109
          %v1118 = vadd.f32 %v1032, %v1097
          %v1119 = vadd.f32 %v1033, %v1101
          %v1120 = vadd.f32 %v1034, %v1105
          %v1121 = vadd.f32 %v1035, %v1109
          %v1122 = vadd.f32 %v1036, %v1097
          %v1123 = vadd.f32 %v1037, %v1101
          %v1124 = vadd.f32 %v1038, %v1105
          %v1125 = vadd.f32 %v1039, %v1109
          %v1126 = vadd.f32 %v1040, %v1097
          %v1127 = vadd.f32 %v1041, %v1101
          %v1128 = vadd.f32 %v1042, %v1105
          %v1129 = vadd.f32 %v1043, %v1109
          %v1130 = vadd.f32 %v1044, %v1097
          %v1131 = vadd.f32 %v1045, %v1101
          %v1132 = vadd.f32 %v1046, %v1105
          %v1133 = vadd.f32 %v1047, %v1109
          %v1134 = vadd.f32 %v1048, %v1097
          %v1135 = vadd.f32 %v1049, %v1101
          %v1136 = vadd.f32 %v1050, %v1105
          %v1137 = vadd.f32 %v1051, %v1109
          %v1138 = vadd.f32 %v1052, %v1097
          %v1139 = vadd.f32 %v1053, %v1101
          %v1140 = vadd.f32 %v1054, %v1105
          %v1141 = vadd.f32 %v1055, %v1109
          %v1142 = vadd.f32 %v1056, %v1097
          %v1143 = vadd.f32 %v1057, %v1101
          %v1144 = vadd.f32 %v1058, %v1105
          %v1145 = vadd.f32 %v1059, %v1109
          %v1146 = vadd.f32 %v1060, %v1097
          %v1147 = vadd.f32 %v1061, %v1101
          %v1148 = vadd.f32 %v1062, %v1105
          %v1149 = vadd.f32 %v1063, %v1109
          %v1150 = vadd.f32 %v1064, %v1097
          %v1151 = vadd.f32 %v1065, %v1101
          %v1152 = vadd.f32 %v1066, %v1105
          %v1153 = vadd.f32 %v1067, %v1109
          %v1154 = vadd.f32 %v1068, %v1097
          %v1155 = vadd.f32 %v1069, %v1101
          %v1156 = vadd.f32 %v1070, %v1105
          %v1157 = vadd.f32 %v1071, %v1109
          %v1158 = vadd.f32 %v1072, %v1097
          %v1159 = vadd.f32 %v1073, %v1101
          %v1160 = vadd.f32 %v1074, %v1105
          %v1161 = vadd.f32 %v1075, %v1109
          %v1162 = vadd.f32 %v1076, %v1097
          %v1163 = vadd.f32 %v1077, %v1101
          %v1164 = vadd.f32 %v1078, %v1105
          %v1165 = vadd.f32 %v1079, %v1109
          %v1166 = vadd.f32 %v1080, %v1097
          %v1167 = vadd.f32 %v1081, %v1101
          %v1168 = vadd.f32 %v1082, %v1105
          %v1169 = vadd.f32 %v1083, %v1109
          %v1170 = vadd.f32 %v1084, %v1097
          %v1171 = vadd.f32 %v1085, %v1101
          %v1172 = vadd.f32 %v1086, %v1105
          %v1173 = vadd.f32 %v1087, %v1109
          %v1174 = vadd.f32 %v1088, %v1097
          %v1175 = vadd.f32 %v1089, %v1101
          %v1176 = vadd.f32 %v1090, %v1105
          %v1177 = vadd.f32 %v1091, %v1109
          %v1178 = vpack.c.bf16 %v1118, %v1114
          %v1179 = vpack.c.bf16 %v1119, %v1115
          %v1180 = vpack.c.bf16 %v1120, %v1116
          %v1181 = vpack.c.bf16 %v1121, %v1117
          %v1182 = vpack.c.bf16 %v1126, %v1122
          %v1183 = vpack.c.bf16 %v1127, %v1123
          %v1184 = vpack.c.bf16 %v1128, %v1124
          %v1185 = vpack.c.bf16 %v1129, %v1125
          %v1186 = vpack.c.bf16 %v1134, %v1130
          %v1187 = vpack.c.bf16 %v1135, %v1131
          %v1188 = vpack.c.bf16 %v1136, %v1132
          %v1189 = vpack.c.bf16 %v1137, %v1133
          %v1190 = vpack.c.bf16 %v1142, %v1138
          %v1191 = vpack.c.bf16 %v1143, %v1139
          %v1192 = vpack.c.bf16 %v1144, %v1140
          %v1193 = vpack.c.bf16 %v1145, %v1141
          %v1194 = vpack.c.bf16 %v1150, %v1146
          %v1195 = vpack.c.bf16 %v1151, %v1147
          %v1196 = vpack.c.bf16 %v1152, %v1148
          %v1197 = vpack.c.bf16 %v1153, %v1149
          %v1198 = vpack.c.bf16 %v1158, %v1154
          %v1199 = vpack.c.bf16 %v1159, %v1155
          %v1200 = vpack.c.bf16 %v1160, %v1156
          %v1201 = vpack.c.bf16 %v1161, %v1157
          %v1202 = vpack.c.bf16 %v1166, %v1162
          %v1203 = vpack.c.bf16 %v1167, %v1163
          %v1204 = vpack.c.bf16 %v1168, %v1164
          %v1205 = vpack.c.bf16 %v1169, %v1165
          %v1206 = vpack.c.bf16 %v1174, %v1170
          %v1207 = vpack.c.bf16 %v1175, %v1171
          %v1208 = vpack.c.bf16 %v1176, %v1172
          %v1209 = vpack.c.bf16 %v1177, %v1173
          %v1242 = vunpack.c.l.b16 %v1178
          %v1243 = vunpack.c.l.b16 %v1179
          %v1244 = vunpack.c.l.b16 %v1180
          %v1245 = vunpack.c.l.b16 %v1181
          %v1246 = vunpack.c.h.b16 %v1178
          %v1247 = vunpack.c.h.b16 %v1179
          %v1248 = vunpack.c.h.b16 %v1180
          %v1249 = vunpack.c.h.b16 %v1181
          %v1250 = vunpack.c.l.b16 %v1182
          %v1251 = vunpack.c.l.b16 %v1183
          %v1252 = vunpack.c.l.b16 %v1184
          %v1253 = vunpack.c.l.b16 %v1185
          %v1254 = vunpack.c.h.b16 %v1182
          %v1255 = vunpack.c.h.b16 %v1183
          %v1256 = vunpack.c.h.b16 %v1184
          %v1257 = vunpack.c.h.b16 %v1185
          %v1258 = vunpack.c.l.b16 %v1186
          %v1259 = vunpack.c.l.b16 %v1187
          %v1260 = vunpack.c.l.b16 %v1188
          %v1261 = vunpack.c.l.b16 %v1189
          %v1262 = vunpack.c.h.b16 %v1186
          %v1263 = vunpack.c.h.b16 %v1187
          %v1264 = vunpack.c.h.b16 %v1188
          %v1265 = vunpack.c.h.b16 %v1189
          %v1266 = vunpack.c.l.b16 %v1190
          %v1267 = vunpack.c.l.b16 %v1191
          %v1268 = vunpack.c.l.b16 %v1192
          %v1269 = vunpack.c.l.b16 %v1193
          %v1270 = vunpack.c.h.b16 %v1190
          %v1271 = vunpack.c.h.b16 %v1191
          %v1272 = vunpack.c.h.b16 %v1192
          %v1273 = vunpack.c.h.b16 %v1193
          %v1274 = vunpack.c.l.b16 %v1194
          %v1275 = vunpack.c.l.b16 %v1195
          %v1276 = vunpack.c.l.b16 %v1196
          %v1277 = vunpack.c.l.b16 %v1197
          %v1278 = vunpack.c.h.b16 %v1194
          %v1279 = vunpack.c.h.b16 %v1195
          %v1280 = vunpack.c.h.b16 %v1196
          %v1281 = vunpack.c.h.b16 %v1197
          %v1282 = vunpack.c.l.b16 %v1198
          %v1283 = vunpack.c.l.b16 %v1199
          %v1284 = vunpack.c.l.b16 %v1200
          %v1285 = vunpack.c.l.b16 %v1201
          %v1286 = vunpack.c.h.b16 %v1198
          %v1287 = vunpack.c.h.b16 %v1199
          %v1288 = vunpack.c.h.b16 %v1200
          %v1289 = vunpack.c.h.b16 %v1201
          %v1290 = vunpack.c.l.b16 %v1202
          %v1291 = vunpack.c.l.b16 %v1203
          %v1292 = vunpack.c.l.b16 %v1204
          %v1293 = vunpack.c.l.b16 %v1205
          %v1294 = vunpack.c.h.b16 %v1202
          %v1295 = vunpack.c.h.b16 %v1203
          %v1296 = vunpack.c.h.b16 %v1204
          %v1297 = vunpack.c.h.b16 %v1205
          %v1298 = vunpack.c.l.b16 %v1206
          %v1299 = vunpack.c.l.b16 %v1207
          %v1300 = vunpack.c.l.b16 %v1208
          %v1301 = vunpack.c.l.b16 %v1209
          %v1302 = vunpack.c.h.b16 %v1206
          %v1303 = vunpack.c.h.b16 %v1207
          %v1304 = vunpack.c.h.b16 %v1208
          %v1305 = vunpack.c.h.b16 %v1209
          %v1306 = vpack.c.b16 %v1243, %v1242
          %v1307 = vpack.c.b16 %v1245, %v1244
          %v1308 = vpack.c.b16 %v1247, %v1246
          %v1309 = vpack.c.b16 %v1249, %v1248
          %v1310 = vpack.c.b16 %v1251, %v1250
          %v1311 = vpack.c.b16 %v1253, %v1252
          %v1312 = vpack.c.b16 %v1255, %v1254
          %v1313 = vpack.c.b16 %v1257, %v1256
          %v1314 = vpack.c.b16 %v1259, %v1258
          %v1315 = vpack.c.b16 %v1261, %v1260
          %v1316 = vpack.c.b16 %v1263, %v1262
          %v1317 = vpack.c.b16 %v1265, %v1264
          %v1318 = vpack.c.b16 %v1267, %v1266
          %v1319 = vpack.c.b16 %v1269, %v1268
          %v1320 = vpack.c.b16 %v1271, %v1270
          %v1321 = vpack.c.b16 %v1273, %v1272
          %v1322 = vpack.c.b16 %v1275, %v1274
          %v1323 = vpack.c.b16 %v1277, %v1276
          %v1324 = vpack.c.b16 %v1279, %v1278
          %v1325 = vpack.c.b16 %v1281, %v1280
          %v1326 = vpack.c.b16 %v1283, %v1282
          %v1327 = vpack.c.b16 %v1285, %v1284
          %v1328 = vpack.c.b16 %v1287, %v1286
          %v1329 = vpack.c.b16 %v1289, %v1288
          %v1330 = vpack.c.b16 %v1291, %v1290
          %v1331 = vpack.c.b16 %v1293, %v1292
          %v1332 = vpack.c.b16 %v1295, %v1294
          %v1333 = vpack.c.b16 %v1297, %v1296
          %v1334 = vpack.c.b16 %v1299, %v1298
          %v1335 = vpack.c.b16 %v1301, %v1300
          %v1336 = vpack.c.b16 %v1303, %v1302
          %v1337 = vpack.c.b16 %v1305, %v1304
          %1370 = vst [vmem:[%s275] sm:$0xff] %v1306
          %1371 = vst [vmem:[%s275 + $0x8] sm:$0xff] %v1307
          %1372 = vst [vmem:[%s275 + $0x10] sm:$0xff] %v1308
          %1373 = vst [vmem:[%s275 + $0x18] sm:$0xff] %v1309
          %1374 = vst [vmem:[%s275 + $0x20] sm:$0xff] %v1310
          %1375 = vst [vmem:[%s275 + $0x28] sm:$0xff] %v1311
          %1376 = vst [vmem:[%s275 + $0x30] sm:$0xff] %v1312
          %1377 = vst [vmem:[%s275 + $0x38] sm:$0xff] %v1313
          %1378 = vst [vmem:[%s275 + $0x40] sm:$0xff] %v1314
          %1379 = vst [vmem:[%s275 + $0x48] sm:$0xff] %v1315
          %1380 = vst [vmem:[%s275 + $0x50] sm:$0xff] %v1316
          %1381 = vst [vmem:[%s275 + $0x58] sm:$0xff] %v1317
          %1382 = vst [vmem:[%s275 + $0x60] sm:$0xff] %v1318
          %1383 = vst [vmem:[%s275 + $0x68] sm:$0xff] %v1319
          %1384 = vst [vmem:[%s275 + $0x70] sm:$0xff] %v1320
          %1385 = vst [vmem:[%s275 + $0x78] sm:$0xff] %v1321
          %1386 = vst [vmem:[%s275 + $0x80] sm:$0xff] %v1322
          %1387 = vst [vmem:[%s275 + $0x88] sm:$0xff] %v1323
          %1388 = vst [vmem:[%s275 + $0x90] sm:$0xff] %v1324
          %1389 = vst [vmem:[%s275 + $0x98] sm:$0xff] %v1325
          %1390 = vst [vmem:[%s275 + $0xa0] sm:$0xff] %v1326
          %1391 = vst [vmem:[%s275 + $0xa8] sm:$0xff] %v1327
          %1392 = vst [vmem:[%s275 + $0xb0] sm:$0xff] %v1328
          %1393 = vst [vmem:[%s275 + $0xb8] sm:$0xff] %v1329
          %1394 = vst [vmem:[%s275 + $0xc0] sm:$0xff] %v1330
          %1395 = vst [vmem:[%s275 + $0xc8] sm:$0xff] %v1331
          %1396 = vst [vmem:[%s275 + $0xd0] sm:$0xff] %v1332
          %1397 = vst [vmem:[%s275 + $0xd8] sm:$0xff] %v1333
          %1398 = vst [vmem:[%s275 + $0xe0] sm:$0xff] %v1334
          %1399 = vst [vmem:[%s275 + $0xe8] sm:$0xff] %v1335
          %1400 = vst [vmem:[%s275 + $0xf0] sm:$0xff] %v1336
          %1401 = vst [vmem:[%s275 + $0xf8] sm:$0xff] %v1337
        $region52: #{tpu_custom_call.1} parent=31 // pred_fallthru
          _
        %s1402 = sand.u32 %s132, 1
        %s1403 = scalar_lea.sflag [#allocation5], %s1402
        %s1404 = sand.u32 %s132, 1
        %s1405 = smul.addr %s1404, 256
        %s1406 = scalar_lea.vmem [#allocation9], %s1405
        // Predicated region
        $region53: #{tpu_custom_call.1} parent=31 // pred_check
          %p1407 = pneg %p142
        $region54: #{tpu_custom_call.1} parent=31 // pred_check_branch
          %1409 = sbr.rel (%p1407) target = $region56
        $region55: #{tpu_custom_call.1} parent=31 // pred_region
          %s1410 = smul.u32 16, %s26
          %s1411 = smul.u32 4, %s27
          %s1413 = ssub.s32 4096, 4096
          %1414 = vsyncadd %s1403, %s1413
          %s1415 = smul.addr %s1410, 8
          %s1416 = sadd.s32 %s1411, %s1415
          %s1417 = smul.addr %s1416, 64
          %s1418 = scalar_lea.hbm %s3, %s1417
          %s1419 = sshll.u32 %s1406, 4
          %s1420 = int_to_ptr.vmem [resolvable:$true] %s1419
          %1425 = dma.vmem_to_hbm [thread:$0]  %s1420, 4096, %s1418, %s1403, 256, 512, 16
        $region56: #{tpu_custom_call.1} parent=31 // pred_fallthru
          _
      $region32: #{tpu_custom_call.1} parent=5 // pred_fallthru
        _
      %p1426 = scmp.le.s32.totalorder 2, %s16
      // Predicated region
      $region57: #{tpu_custom_call.1} parent=5 // pred_check
        %p1427 = pneg %p1426
      $region58: #{tpu_custom_call.1} parent=5 // pred_check_branch
        %1429 = sbr.rel (%p1427) target = $region60
      $region59: #{tpu_custom_call.1} parent=5 // pred_region
        %s1430 = ssub.s32 %s16, 2
        // Predicated region
        $region61: #{tpu_custom_call.1} parent=59 // pred_check
          %p1431 = pneg %p148
        $region62: #{tpu_custom_call.1} parent=59 // pred_check_branch
          %1433 = sbr.rel (%p1431) target = $region64
        $region63: #{tpu_custom_call.1} parent=59 // pred_region
          %s1434 = sand.u32 %s133, 1
          %s1435 = scalar_lea.sflag [#allocation5], %s1434
          %s1436 = sand.u32 %s133, 1
          %s1437 = smul.addr %s1436, 256
          %s1438 = scalar_lea.vmem [#allocation9], %s1437
          %1439 = dma.done %s1435, 4096
        $region64: #{tpu_custom_call.1} parent=59 // pred_fallthru
          _
      $region60: #{tpu_custom_call.1} parent=5 // pred_fallthru
        _
    $region6: #{tpu_custom_call.1} parent=1 // loop_footer
      %s20 = sadd.s32 1, %s16
    $region7: #{tpu_custom_call.1} parent=1 // loop_footer_branch
      %15 = sbr.rel target = $region3
    $region8: #{tpu_custom_call.1} parent=1 // loop_exit
      _
    %1440 = vsyncpa [#allocation4], 1
    %s1441 = scalar_lea.sflag [#allocation4], 1
    %1442 = vsyncpa %s1441, 1
    %1443 = vsyncpa [#allocation7], 1
    %s1444 = scalar_lea.sflag [#allocation7], 1
    %1445 = vsyncpa %s1444, 1
    %1446 = vsyncpa [#allocation5], 1
    %s1447 = scalar_lea.sflag [#allocation5], 1
    %1448 = vsyncpa %s1447, 1

</llo_original>
